<compile_context>
chip_gen: v7x
topology: tpu7x:2x2x1
jax: 0.10.0
libtpu: 0.0.40
codegen_flags: <defaults>
</compile_context>

<pallas_src>
import functools
import math

import jax
import jax.numpy as jnp
from jax.experimental import pallas as pl
from jax.experimental.pallas import tpu as pltpu


# ----------------------------- in-kernel helpers -----------------------------

def _layernorm(x, g, b):
    mean = jnp.mean(x, axis=-1, keepdims=True)
    var = jnp.mean((x - mean) ** 2, axis=-1, keepdims=True)
    inv = jax.lax.rsqrt(var + 1e-5)            # PyTorch LayerNorm default eps
    return (x - mean) * inv * g + b


# --------------------------- fully fused forward kernel ----------------------

def _forward_kernel(H, Dk, Dv, layers,
                    x_ref,
                    qkv_w_ref, qkv_b_ref, ow_ref, ob_ref,
                    ln1_g_ref, ln1_b_ref, ln2_g_ref, ln2_b_ref,
                    ff1_w_ref, ff1_b_ref, ff2_w_ref, ff2_b_ref,
                    norm_g_ref, norm_b_ref, out_w_ref, out_b_ref,
                    o_ref):
    x = x_ref[0]                                            # [T, C]
    T, C = x.shape
    HDk = H * Dk

    # Causal mask built ONCE, reused for every head in every layer.
    row = jax.lax.broadcasted_iota(jnp.int32, (T, T), 0)
    col = jax.lax.broadcasted_iota(jnp.int32, (T, T), 1)
    tril = row >= col

    # All layers share the same weights (ModuleList([block] * layers)).
    for _ in range(layers):
        # --- LN1 + fused QKV projection (1/sqrt(key_dim) pre-folded into q) ---
        xn = _layernorm(x, ln1_g_ref[...], ln1_b_ref[...])
        qkv = jnp.dot(xn, qkv_w_ref[...],
                      preferred_element_type=jnp.float32) + qkv_b_ref[...]

        # --- per-head causal attention ---
        ys = []
        for h in range(H):
            q = qkv[:, h * Dk:(h + 1) * Dk]
            k = qkv[:, HDk + h * Dk:HDk + (h + 1) * Dk]
            v = qkv[:, 2 * HDk + h * Dv:2 * HDk + (h + 1) * Dv]
            s = jax.lax.dot_general(q, k, (((1,), (1,)), ((), ())),
                                    preferred_element_type=jnp.float32)  # q@k^T
            # Reproduce the PyTorch quirk exactly:
            #   scores = torch.tril(scores); scores[scores == 0.0] = -inf
            s = jnp.where(tril, s, 0.0)
            s = jnp.where(s == 0.0, -jnp.inf, s)
            m = jnp.max(s, axis=-1, keepdims=True)
            p = jnp.exp(s - m)
            p = p / jnp.sum(p, axis=-1, keepdims=True)       # exact divide
            ys.append(jnp.dot(p, v, preferred_element_type=jnp.float32))

        # --- concat heads + ONE block-diagonal output projection ---
        y = jnp.concatenate(ys, axis=1)                      # [T, H*Dv]
        attn = jnp.dot(y, ow_ref[...],
                       preferred_element_type=jnp.float32) + ob_ref[...]
        x1 = x + attn                                        # residual 1

        # --- LN2 + feed-forward + residual 2 ---
        xn2 = _layernorm(x1, ln2_g_ref[...], ln2_b_ref[...])
        hdn = jnp.dot(xn2, ff1_w_ref[...],
                      preferred_element_type=jnp.float32) + ff1_b_ref[...]
        hdn = jnp.maximum(hdn, 0.0)
        ff = jnp.dot(hdn, ff2_w_ref[...],
                     preferred_element_type=jnp.float32) + ff2_b_ref[...]
        x = x1 + ff

    # --- final LayerNorm + vocab head (lane-dense padded output) ---
    xn = _layernorm(x, norm_g_ref[...], norm_b_ref[...])
    logits = jnp.dot(xn, out_w_ref[...],
                     preferred_element_type=jnp.float32) + out_b_ref[...]
    o_ref[0] = logits.astype(o_ref.dtype)


def bigram_forward_fused(fused, x, layers):
    """x: [B, T, C] f32 embeddings (token + pos). Returns padded logits."""
    B, T, C = x.shape
    bp, hp = fused["block"], fused["head"]
    H, Dk, Dv = bp["H"], bp["Dk"], bp["Dv"]
    Vp = hp["out_w_pad"].shape[1]

    weights = (bp["qkv_w"], bp["qkv_b"], bp["o_w"], bp["o_b"],
               bp["ln1_g"], bp["ln1_b"], bp["ln2_g"], bp["ln2_b"],
               bp["ff1_w"], bp["ff1_b"], bp["ff2_w"], bp["ff2_b"],
               hp["norm_g"], hp["norm_b"], hp["out_w_pad"], hp["out_b_pad"])

    def full_spec(a):
        n = a.ndim
        return pl.BlockSpec(a.shape, lambda b, n=n: (0,) * n)

    return pl.pallas_call(
        functools.partial(_forward_kernel, H, Dk, Dv, layers),
        out_shape=jax.ShapeDtypeStruct((B, T, Vp), jnp.float32),
        grid=(B,),
        in_specs=[pl.BlockSpec((1, T, C), lambda b: (b, 0, 0))]
                 + [full_spec(w) for w in weights],
        out_specs=pl.BlockSpec((1, T, Vp), lambda b: (b, 0, 0)),
        compiler_params=pltpu.CompilerParams(
            dimension_semantics=("parallel",),
            vmem_limit_bytes=32 * 1024 * 1024),
    )(x, *weights)


# ------------------------------ forward (JAX glue) ----------------------------

def bigram_lm_forward(fused, tokens, layers):
    B, T = tokens.shape
    tok = jnp.take(fused["token_lut"], tokens, axis=0)        # [B, T, E]
    pos = jnp.take(fused["pos_lut"], jnp.arange(T), axis=0)   # [T, E]
    x = tok + pos[None, :, :]
    logits_pad = bigram_forward_fused(fused, x, layers)       # single kernel
    return logits_pad[:, :, :fused["head"]["vocab_size"]]     # loss is None


# ------------------------------- parameter init -------------------------------

def init_params(key, vocab_size, block_size, embed_dim, attn_heads):
    key_dim = embed_dim // attn_heads
    value_dim = key_dim
    head_size = embed_dim // attn_heads
    last_head_size = head_size + (embed_dim - attn_heads * head_size)

    def nrm(k, shape, scale=0.02):
        return scale * jax.random.normal(k, shape, dtype=jnp.float32)

    keys = iter(jax.random.split(key, 64))
    heads = []
    for h in range(attn_heads):
        out_dim = last_head_size if h == attn_heads - 1 else head_size
        heads.append(dict(
            q_w=nrm(next(keys), (embed_dim, key_dim)), q_b=nrm(next(keys), (key_dim,)),
            k_w=nrm(next(keys), (embed_dim, key_dim)), k_b=nrm(next(keys), (key_dim,)),
            v_w=nrm(next(keys), (embed_dim, value_dim)), v_b=nrm(next(keys), (value_dim,)),
            o_w=nrm(next(keys), (value_dim, out_dim)), o_b=nrm(next(keys), (out_dim,)),
        ))
    block = dict(
        ln1_g=jnp.ones((embed_dim,), jnp.float32), ln1_b=jnp.zeros((embed_dim,), jnp.float32),
        ln2_g=jnp.ones((embed_dim,), jnp.float32), ln2_b=jnp.zeros((embed_dim,), jnp.float32),
        heads=heads,
        ff1_w=nrm(next(keys), (embed_dim, 4 * embed_dim)), ff1_b=nrm(next(keys), (4 * embed_dim,)),
        ff2_w=nrm(next(keys), (4 * embed_dim, embed_dim)), ff2_b=nrm(next(keys), (embed_dim,)),
    )
    return dict(
        token_lut=nrm(next(keys), (vocab_size, embed_dim), scale=1.0),
        pos_lut=nrm(next(keys), (block_size, embed_dim), scale=1.0),
        block=block,
        norm_g=jnp.ones((embed_dim,), jnp.float32),
        norm_b=jnp.zeros((embed_dim,), jnp.float32),
        out_w=nrm(next(keys), (embed_dim, vocab_size)),
        out_b=nrm(next(keys), (vocab_size,)),
        key_dim=key_dim,
    )


def prepare_fused_params(params, attn_heads):
    """Fold per-head weights into lane-dense fused tensors. Applied ONCE,
    globally -- every layer reuses the same shared block weights."""
    blk = params["block"]
    heads = blk["heads"]
    H = attn_heads
    Dk = heads[0]["q_w"].shape[1]
    Dv = heads[0]["v_w"].shape[1]
    C = blk["ln1_g"].shape[0]
    scale = 1.0 / math.sqrt(params["key_dim"])

    # Fused QKV layout: [ q(H*Dk) | k(H*Dk) | v(H*Dv) ]; scale folded into q.
    q_w = jnp.concatenate([h["q_w"] * scale for h in heads], axis=1)
    q_b = jnp.concatenate([h["q_b"] * scale for h in heads], axis=0)
    k_w = jnp.concatenate([h["k_w"] for h in heads], axis=1)
    k_b = jnp.concatenate([h["k_b"] for h in heads], axis=0)
    v_w = jnp.concatenate([h["v_w"] for h in heads], axis=1)
    v_b = jnp.concatenate([h["v_b"] for h in heads], axis=0)
    qkv_w = jnp.concatenate([q_w, k_w, v_w], axis=1)
    qkv_b = jnp.concatenate([q_b, k_b, v_b], axis=0).reshape(1, -1)

    # Block-diagonal output projection [H*Dv, C]:
    #   concat_h(y_h @ o_w_h)  ==  concat_h(y_h) @ o_w_blockdiag
    out_dims = [h["o_w"].shape[1] for h in heads]
    o_w = jnp.zeros((H * Dv, sum(out_dims)), jnp.float32)
    off = 0
    for h_idx, h in enumerate(heads):
        o_w = o_w.at[h_idx * Dv:(h_idx + 1) * Dv,
                     off:off + out_dims[h_idx]].set(h["o_w"])
        off += out_dims[h_idx]
    o_b = jnp.concatenate([h["o_b"] for h in heads], axis=0).reshape(1, -1)

    block = dict(
        H=H, Dk=Dk, Dv=Dv,
        qkv_w=qkv_w, qkv_b=qkv_b, o_w=o_w, o_b=o_b,
        ln1_g=blk["ln1_g"].reshape(1, C), ln1_b=blk["ln1_b"].reshape(1, C),
        ln2_g=blk["ln2_g"].reshape(1, C), ln2_b=blk["ln2_b"].reshape(1, C),
        ff1_w=blk["ff1_w"], ff1_b=blk["ff1_b"].reshape(1, -1),
        ff2_w=blk["ff2_w"], ff2_b=blk["ff2_b"].reshape(1, -1),
    )

    # Pad vocab projection to a 128-lane multiple (unmasked lane-dense stores);
    # the wrapper slices logits back to the true vocab size.
    V = params["out_w"].shape[1]
    Vp = 128 * ((V + 127) // 128)
    out_w_pad = jnp.zeros((C, Vp), jnp.float32).at[:, :V].set(params["out_w"])
    out_b_pad = jnp.zeros((1, Vp), jnp.float32).at[0, :V].set(params["out_b"])
    head = dict(norm_g=params["norm_g"].reshape(1, C),
                norm_b=params["norm_b"].reshape(1, C),
                out_w_pad=out_w_pad, out_b_pad=out_b_pad,
                vocab_size=V)

    return dict(token_lut=params["token_lut"], pos_lut=params["pos_lut"],
                block=block, head=head)


# ------------------------------------ main ------------------------------------

if __name__ == "__main__":
    # Small, forward-consistent shapes.
    vocab_size, layers, block_size, embed_dim, attn_heads = 65, 2, 16, 32, 2
    B, T = 2, 8

    root = jax.random.PRNGKey(0)
    k_params, k_tok = jax.random.split(root)
    params = init_params(k_params, vocab_size, block_size, embed_dim, attn_heads)
    fused = prepare_fused_params(params, attn_heads)
    tokens = jax.random.randint(k_tok, (B, T), 0, vocab_size, dtype=jnp.int32)

    # Jit via closure so the structural ints (H, Dk, Dv, layers) stay static.
    fwd = jax.jit(lambda toks: bigram_lm_forward(fused, toks, layers))
    logits = fwd(tokens)
    jax.block_until_ready(logits)
    assert logits.shape == (B, T, vocab_size)
    assert logits.dtype == jnp.float32
    assert bool(jnp.all(jnp.isfinite(logits)))
    print("KERNEL_OK")
</pallas_src>

<mosaic_0001>
module attributes {stable_mosaic.version = 11 : i64} {
  func.func @_forward_kernel(%arg0: i32, %arg1: memref<1x8x32xf32, #tpu.memory_space<vmem>>, %arg2: memref<32x96xf32, #tpu.memory_space<vmem>>, %arg3: memref<1x96xf32, #tpu.memory_space<vmem>>, %arg4: memref<32x32xf32, #tpu.memory_space<vmem>>, %arg5: memref<1x32xf32, #tpu.memory_space<vmem>>, %arg6: memref<1x32xf32, #tpu.memory_space<vmem>>, %arg7: memref<1x32xf32, #tpu.memory_space<vmem>>, %arg8: memref<1x32xf32, #tpu.memory_space<vmem>>, %arg9: memref<1x32xf32, #tpu.memory_space<vmem>>, %arg10: memref<32x128xf32, #tpu.memory_space<vmem>>, %arg11: memref<1x128xf32, #tpu.memory_space<vmem>>, %arg12: memref<128x32xf32, #tpu.memory_space<vmem>>, %arg13: memref<1x32xf32, #tpu.memory_space<vmem>>, %arg14: memref<1x32xf32, #tpu.memory_space<vmem>>, %arg15: memref<1x32xf32, #tpu.memory_space<vmem>>, %arg16: memref<32x128xf32, #tpu.memory_space<vmem>>, %arg17: memref<1x128xf32, #tpu.memory_space<vmem>>, %arg18: memref<1x8x128xf32, #tpu.memory_space<vmem>>) attributes {dimension_semantics = [#tpu.dimension_semantics<parallel>], iteration_bounds = array<i64: 2>, scalar_prefetch = 0 : i64, scratch_operands = 0 : i64, tpu.core_type = #tpu.core_type<tc>, window_params = [{transform_indices = @transform_0, window_bounds = array<i64: 1, 8, 32>}, {pipeline_mode = #tpu.pipeline_mode<synchronous>, transform_indices = @transform_1, window_bounds = array<i64: 32, 96>}, {pipeline_mode = #tpu.pipeline_mode<synchronous>, transform_indices = @transform_2, window_bounds = array<i64: 1, 96>}, {pipeline_mode = #tpu.pipeline_mode<synchronous>, transform_indices = @transform_3, window_bounds = array<i64: 32, 32>}, {pipeline_mode = #tpu.pipeline_mode<synchronous>, transform_indices = @transform_4, window_bounds = array<i64: 1, 32>}, {pipeline_mode = #tpu.pipeline_mode<synchronous>, transform_indices = @transform_5, window_bounds = array<i64: 1, 32>}, {pipeline_mode = #tpu.pipeline_mode<synchronous>, transform_indices = @transform_6, window_bounds = array<i64: 1, 32>}, {pipeline_mode = #tpu.pipeline_mode<synchronous>, transform_indices = @transform_7, window_bounds = array<i64: 1, 32>}, {pipeline_mode = #tpu.pipeline_mode<synchronous>, transform_indices = @transform_8, window_bounds = array<i64: 1, 32>}, {pipeline_mode = #tpu.pipeline_mode<synchronous>, transform_indices = @transform_9, window_bounds = array<i64: 32, 128>}, {pipeline_mode = #tpu.pipeline_mode<synchronous>, transform_indices = @transform_10, window_bounds = array<i64: 1, 128>}, {pipeline_mode = #tpu.pipeline_mode<synchronous>, transform_indices = @transform_11, window_bounds = array<i64: 128, 32>}, {pipeline_mode = #tpu.pipeline_mode<synchronous>, transform_indices = @transform_12, window_bounds = array<i64: 1, 32>}, {pipeline_mode = #tpu.pipeline_mode<synchronous>, transform_indices = @transform_13, window_bounds = array<i64: 1, 32>}, {pipeline_mode = #tpu.pipeline_mode<synchronous>, transform_indices = @transform_14, window_bounds = array<i64: 1, 32>}, {pipeline_mode = #tpu.pipeline_mode<synchronous>, transform_indices = @transform_15, window_bounds = array<i64: 32, 128>}, {pipeline_mode = #tpu.pipeline_mode<synchronous>, transform_indices = @transform_16, window_bounds = array<i64: 1, 128>}, {transform_indices = @transform_17, window_bounds = array<i64: 1, 8, 128>}]} {
    %c0 = arith.constant 0 : index
    %c0_0 = arith.constant 0 : index
    %c0_1 = arith.constant 0 : index
    %0 = vector.load %arg1[%c0, %c0_0, %c0_1] : memref<1x8x32xf32, #tpu.memory_space<vmem>>, vector<1x8x32xf32>
    %1 = vector.shape_cast %0 : vector<1x8x32xf32> to vector<8x32xf32>
    %2 = tpu.iota {dimensions = array<i32: 0>} : vector<8x8xi32>
    %3 = tpu.iota {dimensions = array<i32: 1>} : vector<8x8xi32>
    %4 = arith.cmpi sge, %2, %3 : vector<8x8xi32>
    %c0_2 = arith.constant 0 : index
    %c0_3 = arith.constant 0 : index
    %5 = vector.load %arg6[%c0_2, %c0_3] : memref<1x32xf32, #tpu.memory_space<vmem>>, vector<1x32xf32>
    %c0_4 = arith.constant 0 : index
    %c0_5 = arith.constant 0 : index
    %6 = vector.load %arg7[%c0_4, %c0_5] : memref<1x32xf32, #tpu.memory_space<vmem>>, vector<1x32xf32>
    %cst = arith.constant dense<0.000000e+00> : vector<8xf32>
    %7 = vector.multi_reduction <add>, %1, %cst [1] : vector<8x32xf32> to vector<8xf32>
    %8 = vector.shape_cast %7 : vector<8xf32> to vector<8x1xf32>
    %cst_6 = arith.constant 3.200000e+01 : f32
    %9 = vector.broadcast %cst_6 : f32 to vector<8x1xf32>
    %10 = arith.divf %8, %9 : vector<8x1xf32>
    %11 = vector.broadcast %10 : vector<8x1xf32> to vector<8x32xf32>
    %12 = arith.subf %1, %11 : vector<8x32xf32>
    %13 = arith.mulf %12, %12 : vector<8x32xf32>
    %cst_7 = arith.constant dense<0.000000e+00> : vector<8xf32>
    %14 = vector.multi_reduction <add>, %13, %cst_7 [1] : vector<8x32xf32> to vector<8xf32>
    %15 = vector.shape_cast %14 : vector<8xf32> to vector<8x1xf32>
    %cst_8 = arith.constant 3.200000e+01 : f32
    %16 = vector.broadcast %cst_8 : f32 to vector<8x1xf32>
    %17 = arith.divf %15, %16 : vector<8x1xf32>
    %cst_9 = arith.constant 9.99999974E-6 : f32
    %18 = vector.broadcast %cst_9 : f32 to vector<8x1xf32>
    %19 = arith.addf %17, %18 : vector<8x1xf32>
    %20 = math.rsqrt %19 : vector<8x1xf32>
    %21 = vector.broadcast %10 : vector<8x1xf32> to vector<8x32xf32>
    %22 = arith.subf %1, %21 : vector<8x32xf32>
    %23 = vector.broadcast %20 : vector<8x1xf32> to vector<8x32xf32>
    %24 = arith.mulf %22, %23 : vector<8x32xf32>
    %25 = vector.broadcast %5 : vector<1x32xf32> to vector<8x32xf32>
    %26 = arith.mulf %24, %25 : vector<8x32xf32>
    %27 = vector.broadcast %6 : vector<1x32xf32> to vector<8x32xf32>
    %28 = arith.addf %26, %27 : vector<8x32xf32>
    %c0_10 = arith.constant 0 : index
    %c0_11 = arith.constant 0 : index
    %29 = vector.load %arg2[%c0_10, %c0_11] : memref<32x96xf32, #tpu.memory_space<vmem>>, vector<32x96xf32>
    %cst_12 = arith.constant dense<0.000000e+00> : vector<8x96xf32>
    %30 = tpu.matmul %28, %29, %cst_12 {dimension_numbers = #tpu.dot_dimension_numbers<[1], [0], [0], [1], [0, 0, 1, 1], [], []>} : vector<8x32xf32>, vector<32x96xf32>, vector<8x96xf32> -> vector<8x96xf32>
    %c0_13 = arith.constant 0 : index
    %c0_14 = arith.constant 0 : index
    %31 = vector.load %arg3[%c0_13, %c0_14] : memref<1x96xf32, #tpu.memory_space<vmem>>, vector<1x96xf32>
    %32 = vector.broadcast %31 : vector<1x96xf32> to vector<8x96xf32>
    %33 = arith.addf %30, %32 : vector<8x96xf32>
    %34 = vector.extract_strided_slice %33 {offsets = [0, 0], sizes = [8, 16], strides = [1, 1]} : vector<8x96xf32> to vector<8x16xf32>
    %35 = vector.extract_strided_slice %33 {offsets = [0, 32], sizes = [8, 16], strides = [1, 1]} : vector<8x96xf32> to vector<8x16xf32>
    %36 = vector.extract_strided_slice %33 {offsets = [0, 64], sizes = [8, 16], strides = [1, 1]} : vector<8x96xf32> to vector<8x16xf32>
    %cst_15 = arith.constant dense<0.000000e+00> : vector<8x8xf32>
    %37 = tpu.matmul %34, %35, %cst_15 {dimension_numbers = #tpu.dot_dimension_numbers<[1], [1], [0], [0], [0, 0, 1, 0], [], []>} : vector<8x16xf32>, vector<8x16xf32>, vector<8x8xf32> -> vector<8x8xf32>
    %cst_16 = arith.constant 0.000000e+00 : f32
    %38 = vector.broadcast %cst_16 : f32 to vector<8x8xf32>
    %39 = arith.select %4, %37, %38 : vector<8x8xi1>, vector<8x8xf32>
    %cst_17 = arith.constant 0.000000e+00 : f32
    %40 = vector.broadcast %cst_17 : f32 to vector<8x8xf32>
    %41 = arith.cmpf oeq, %39, %40 : vector<8x8xf32>
    %cst_18 = arith.constant 0xFF800000 : f32
    %42 = vector.broadcast %cst_18 : f32 to vector<8x8xf32>
    %43 = arith.select %41, %42, %39 : vector<8x8xi1>, vector<8x8xf32>
    %cst_19 = arith.constant dense<0xFF800000> : vector<8xf32>
    %44 = vector.multi_reduction <maximumf>, %43, %cst_19 [1] : vector<8x8xf32> to vector<8xf32>
    %45 = vector.shape_cast %44 : vector<8xf32> to vector<8x1xf32>
    %46 = vector.broadcast %45 : vector<8x1xf32> to vector<8x8xf32>
    %47 = arith.subf %43, %46 : vector<8x8xf32>
    %48 = math.exp %47 : vector<8x8xf32>
    %cst_20 = arith.constant dense<0.000000e+00> : vector<8xf32>
    %49 = vector.multi_reduction <add>, %48, %cst_20 [1] : vector<8x8xf32> to vector<8xf32>
    %50 = vector.shape_cast %49 : vector<8xf32> to vector<8x1xf32>
    %51 = vector.broadcast %50 : vector<8x1xf32> to vector<8x8xf32>
    %52 = arith.divf %48, %51 : vector<8x8xf32>
    %cst_21 = arith.constant dense<0.000000e+00> : vector<8x16xf32>
    %53 = tpu.matmul %52, %36, %cst_21 {dimension_numbers = #tpu.dot_dimension_numbers<[1], [0], [0], [1], [0, 0, 1, 1], [], []>} : vector<8x8xf32>, vector<8x16xf32>, vector<8x16xf32> -> vector<8x16xf32>
    %54 = vector.extract_strided_slice %33 {offsets = [0, 16], sizes = [8, 16], strides = [1, 1]} : vector<8x96xf32> to vector<8x16xf32>
    %55 = vector.extract_strided_slice %33 {offsets = [0, 48], sizes = [8, 16], strides = [1, 1]} : vector<8x96xf32> to vector<8x16xf32>
    %56 = vector.extract_strided_slice %33 {offsets = [0, 80], sizes = [8, 16], strides = [1, 1]} : vector<8x96xf32> to vector<8x16xf32>
    %cst_22 = arith.constant dense<0.000000e+00> : vector<8x8xf32>
    %57 = tpu.matmul %54, %55, %cst_22 {dimension_numbers = #tpu.dot_dimension_numbers<[1], [1], [0], [0], [0, 0, 1, 0], [], []>} : vector<8x16xf32>, vector<8x16xf32>, vector<8x8xf32> -> vector<8x8xf32>
    %cst_23 = arith.constant 0.000000e+00 : f32
    %58 = vector.broadcast %cst_23 : f32 to vector<8x8xf32>
    %59 = arith.select %4, %57, %58 : vector<8x8xi1>, vector<8x8xf32>
    %cst_24 = arith.constant 0.000000e+00 : f32
    %60 = vector.broadcast %cst_24 : f32 to vector<8x8xf32>
    %61 = arith.cmpf oeq, %59, %60 : vector<8x8xf32>
    %cst_25 = arith.constant 0xFF800000 : f32
    %62 = vector.broadcast %cst_25 : f32 to vector<8x8xf32>
    %63 = arith.select %61, %62, %59 : vector<8x8xi1>, vector<8x8xf32>
    %cst_26 = arith.constant dense<0xFF800000> : vector<8xf32>
    %64 = vector.multi_reduction <maximumf>, %63, %cst_26 [1] : vector<8x8xf32> to vector<8xf32>
    %65 = vector.shape_cast %64 : vector<8xf32> to vector<8x1xf32>
    %66 = vector.broadcast %65 : vector<8x1xf32> to vector<8x8xf32>
    %67 = arith.subf %63, %66 : vector<8x8xf32>
    %68 = math.exp %67 : vector<8x8xf32>
    %cst_27 = arith.constant dense<0.000000e+00> : vector<8xf32>
    %69 = vector.multi_reduction <add>, %68, %cst_27 [1] : vector<8x8xf32> to vector<8xf32>
    %70 = vector.shape_cast %69 : vector<8xf32> to vector<8x1xf32>
    %71 = vector.broadcast %70 : vector<8x1xf32> to vector<8x8xf32>
    %72 = arith.divf %68, %71 : vector<8x8xf32>
    %cst_28 = arith.constant dense<0.000000e+00> : vector<8x16xf32>
    %73 = tpu.matmul %72, %56, %cst_28 {dimension_numbers = #tpu.dot_dimension_numbers<[1], [0], [0], [1], [0, 0, 1, 1], [], []>} : vector<8x8xf32>, vector<8x16xf32>, vector<8x16xf32> -> vector<8x16xf32>
    %74 = tpu.concatenate %53, %73 in 1 : vector<8x16xf32>, vector<8x16xf32> -> vector<8x32xf32>
    %c0_29 = arith.constant 0 : index
    %c0_30 = arith.constant 0 : index
    %75 = vector.load %arg4[%c0_29, %c0_30] : memref<32x32xf32, #tpu.memory_space<vmem>>, vector<32x32xf32>
    %cst_31 = arith.constant dense<0.000000e+00> : vector<8x32xf32>
    %76 = tpu.matmul %74, %75, %cst_31 {dimension_numbers = #tpu.dot_dimension_numbers<[1], [0], [0], [1], [0, 0, 1, 1], [], []>} : vector<8x32xf32>, vector<32x32xf32>, vector<8x32xf32> -> vector<8x32xf32>
    %c0_32 = arith.constant 0 : index
    %c0_33 = arith.constant 0 : index
    %77 = vector.load %arg5[%c0_32, %c0_33] : memref<1x32xf32, #tpu.memory_space<vmem>>, vector<1x32xf32>
    %78 = vector.broadcast %77 : vector<1x32xf32> to vector<8x32xf32>
    %79 = arith.addf %76, %78 : vector<8x32xf32>
    %80 = arith.addf %1, %79 : vector<8x32xf32>
    %c0_34 = arith.constant 0 : index
    %c0_35 = arith.constant 0 : index
    %81 = vector.load %arg8[%c0_34, %c0_35] : memref<1x32xf32, #tpu.memory_space<vmem>>, vector<1x32xf32>
    %c0_36 = arith.constant 0 : index
    %c0_37 = arith.constant 0 : index
    %82 = vector.load %arg9[%c0_36, %c0_37] : memref<1x32xf32, #tpu.memory_space<vmem>>, vector<1x32xf32>
    %cst_38 = arith.constant dense<0.000000e+00> : vector<8xf32>
    %83 = vector.multi_reduction <add>, %80, %cst_38 [1] : vector<8x32xf32> to vector<8xf32>
    %84 = vector.shape_cast %83 : vector<8xf32> to vector<8x1xf32>
    %cst_39 = arith.constant 3.200000e+01 : f32
    %85 = vector.broadcast %cst_39 : f32 to vector<8x1xf32>
    %86 = arith.divf %84, %85 : vector<8x1xf32>
    %87 = vector.broadcast %86 : vector<8x1xf32> to vector<8x32xf32>
    %88 = arith.subf %80, %87 : vector<8x32xf32>
    %89 = arith.mulf %88, %88 : vector<8x32xf32>
    %cst_40 = arith.constant dense<0.000000e+00> : vector<8xf32>
    %90 = vector.multi_reduction <add>, %89, %cst_40 [1] : vector<8x32xf32> to vector<8xf32>
    %91 = vector.shape_cast %90 : vector<8xf32> to vector<8x1xf32>
    %cst_41 = arith.constant 3.200000e+01 : f32
    %92 = vector.broadcast %cst_41 : f32 to vector<8x1xf32>
    %93 = arith.divf %91, %92 : vector<8x1xf32>
    %cst_42 = arith.constant 9.99999974E-6 : f32
    %94 = vector.broadcast %cst_42 : f32 to vector<8x1xf32>
    %95 = arith.addf %93, %94 : vector<8x1xf32>
    %96 = math.rsqrt %95 : vector<8x1xf32>
    %97 = vector.broadcast %86 : vector<8x1xf32> to vector<8x32xf32>
    %98 = arith.subf %80, %97 : vector<8x32xf32>
    %99 = vector.broadcast %96 : vector<8x1xf32> to vector<8x32xf32>
    %100 = arith.mulf %98, %99 : vector<8x32xf32>
    %101 = vector.broadcast %81 : vector<1x32xf32> to vector<8x32xf32>
    %102 = arith.mulf %100, %101 : vector<8x32xf32>
    %103 = vector.broadcast %82 : vector<1x32xf32> to vector<8x32xf32>
    %104 = arith.addf %102, %103 : vector<8x32xf32>
    %c0_43 = arith.constant 0 : index
    %c0_44 = arith.constant 0 : index
    %105 = vector.load %arg10[%c0_43, %c0_44] : memref<32x128xf32, #tpu.memory_space<vmem>>, vector<32x128xf32>
    %cst_45 = arith.constant dense<0.000000e+00> : vector<8x128xf32>
    %106 = tpu.matmul %104, %105, %cst_45 {dimension_numbers = #tpu.dot_dimension_numbers<[1], [0], [0], [1], [0, 0, 1, 1], [], []>} : vector<8x32xf32>, vector<32x128xf32>, vector<8x128xf32> -> vector<8x128xf32>
    %c0_46 = arith.constant 0 : index
    %c0_47 = arith.constant 0 : index
    %107 = vector.load %arg11[%c0_46, %c0_47] : memref<1x128xf32, #tpu.memory_space<vmem>>, vector<1x128xf32>
    %108 = vector.broadcast %107 : vector<1x128xf32> to vector<8x128xf32>
    %109 = arith.addf %106, %108 : vector<8x128xf32>
    %cst_48 = arith.constant 0.000000e+00 : f32
    %110 = vector.broadcast %cst_48 : f32 to vector<8x128xf32>
    %111 = arith.maximumf %109, %110 : vector<8x128xf32>
    %c0_49 = arith.constant 0 : index
    %c0_50 = arith.constant 0 : index
    %112 = vector.load %arg12[%c0_49, %c0_50] : memref<128x32xf32, #tpu.memory_space<vmem>>, vector<128x32xf32>
    %cst_51 = arith.constant dense<0.000000e+00> : vector<8x32xf32>
    %113 = tpu.matmul %111, %112, %cst_51 {dimension_numbers = #tpu.dot_dimension_numbers<[1], [0], [0], [1], [0, 0, 1, 1], [], []>} : vector<8x128xf32>, vector<128x32xf32>, vector<8x32xf32> -> vector<8x32xf32>
    %c0_52 = arith.constant 0 : index
    %c0_53 = arith.constant 0 : index
    %114 = vector.load %arg13[%c0_52, %c0_53] : memref<1x32xf32, #tpu.memory_space<vmem>>, vector<1x32xf32>
    %115 = vector.broadcast %114 : vector<1x32xf32> to vector<8x32xf32>
    %116 = arith.addf %113, %115 : vector<8x32xf32>
    %117 = arith.addf %80, %116 : vector<8x32xf32>
    %c0_54 = arith.constant 0 : index
    %c0_55 = arith.constant 0 : index
    %118 = vector.load %arg6[%c0_54, %c0_55] : memref<1x32xf32, #tpu.memory_space<vmem>>, vector<1x32xf32>
    %c0_56 = arith.constant 0 : index
    %c0_57 = arith.constant 0 : index
    %119 = vector.load %arg7[%c0_56, %c0_57] : memref<1x32xf32, #tpu.memory_space<vmem>>, vector<1x32xf32>
    %cst_58 = arith.constant dense<0.000000e+00> : vector<8xf32>
    %120 = vector.multi_reduction <add>, %117, %cst_58 [1] : vector<8x32xf32> to vector<8xf32>
    %121 = vector.shape_cast %120 : vector<8xf32> to vector<8x1xf32>
    %cst_59 = arith.constant 3.200000e+01 : f32
    %122 = vector.broadcast %cst_59 : f32 to vector<8x1xf32>
    %123 = arith.divf %121, %122 : vector<8x1xf32>
    %124 = vector.broadcast %123 : vector<8x1xf32> to vector<8x32xf32>
    %125 = arith.subf %117, %124 : vector<8x32xf32>
    %126 = arith.mulf %125, %125 : vector<8x32xf32>
    %cst_60 = arith.constant dense<0.000000e+00> : vector<8xf32>
    %127 = vector.multi_reduction <add>, %126, %cst_60 [1] : vector<8x32xf32> to vector<8xf32>
    %128 = vector.shape_cast %127 : vector<8xf32> to vector<8x1xf32>
    %cst_61 = arith.constant 3.200000e+01 : f32
    %129 = vector.broadcast %cst_61 : f32 to vector<8x1xf32>
    %130 = arith.divf %128, %129 : vector<8x1xf32>
    %cst_62 = arith.constant 9.99999974E-6 : f32
    %131 = vector.broadcast %cst_62 : f32 to vector<8x1xf32>
    %132 = arith.addf %130, %131 : vector<8x1xf32>
    %133 = math.rsqrt %132 : vector<8x1xf32>
    %134 = vector.broadcast %123 : vector<8x1xf32> to vector<8x32xf32>
    %135 = arith.subf %117, %134 : vector<8x32xf32>
    %136 = vector.broadcast %133 : vector<8x1xf32> to vector<8x32xf32>
    %137 = arith.mulf %135, %136 : vector<8x32xf32>
    %138 = vector.broadcast %118 : vector<1x32xf32> to vector<8x32xf32>
    %139 = arith.mulf %137, %138 : vector<8x32xf32>
    %140 = vector.broadcast %119 : vector<1x32xf32> to vector<8x32xf32>
    %141 = arith.addf %139, %140 : vector<8x32xf32>
    %c0_63 = arith.constant 0 : index
    %c0_64 = arith.constant 0 : index
    %142 = vector.load %arg2[%c0_63, %c0_64] : memref<32x96xf32, #tpu.memory_space<vmem>>, vector<32x96xf32>
    %cst_65 = arith.constant dense<0.000000e+00> : vector<8x96xf32>
    %143 = tpu.matmul %141, %142, %cst_65 {dimension_numbers = #tpu.dot_dimension_numbers<[1], [0], [0], [1], [0, 0, 1, 1], [], []>} : vector<8x32xf32>, vector<32x96xf32>, vector<8x96xf32> -> vector<8x96xf32>
    %c0_66 = arith.constant 0 : index
    %c0_67 = arith.constant 0 : index
    %144 = vector.load %arg3[%c0_66, %c0_67] : memref<1x96xf32, #tpu.memory_space<vmem>>, vector<1x96xf32>
    %145 = vector.broadcast %144 : vector<1x96xf32> to vector<8x96xf32>
    %146 = arith.addf %143, %145 : vector<8x96xf32>
    %147 = vector.extract_strided_slice %146 {offsets = [0, 0], sizes = [8, 16], strides = [1, 1]} : vector<8x96xf32> to vector<8x16xf32>
    %148 = vector.extract_strided_slice %146 {offsets = [0, 32], sizes = [8, 16], strides = [1, 1]} : vector<8x96xf32> to vector<8x16xf32>
    %149 = vector.extract_strided_slice %146 {offsets = [0, 64], sizes = [8, 16], strides = [1, 1]} : vector<8x96xf32> to vector<8x16xf32>
    %cst_68 = arith.constant dense<0.000000e+00> : vector<8x8xf32>
    %150 = tpu.matmul %147, %148, %cst_68 {dimension_numbers = #tpu.dot_dimension_numbers<[1], [1], [0], [0], [0, 0, 1, 0], [], []>} : vector<8x16xf32>, vector<8x16xf32>, vector<8x8xf32> -> vector<8x8xf32>
    %cst_69 = arith.constant 0.000000e+00 : f32
    %151 = vector.broadcast %cst_69 : f32 to vector<8x8xf32>
    %152 = arith.select %4, %150, %151 : vector<8x8xi1>, vector<8x8xf32>
    %cst_70 = arith.constant 0.000000e+00 : f32
    %153 = vector.broadcast %cst_70 : f32 to vector<8x8xf32>
    %154 = arith.cmpf oeq, %152, %153 : vector<8x8xf32>
    %cst_71 = arith.constant 0xFF800000 : f32
    %155 = vector.broadcast %cst_71 : f32 to vector<8x8xf32>
    %156 = arith.select %154, %155, %152 : vector<8x8xi1>, vector<8x8xf32>
    %cst_72 = arith.constant dense<0xFF800000> : vector<8xf32>
    %157 = vector.multi_reduction <maximumf>, %156, %cst_72 [1] : vector<8x8xf32> to vector<8xf32>
    %158 = vector.shape_cast %157 : vector<8xf32> to vector<8x1xf32>
    %159 = vector.broadcast %158 : vector<8x1xf32> to vector<8x8xf32>
    %160 = arith.subf %156, %159 : vector<8x8xf32>
    %161 = math.exp %160 : vector<8x8xf32>
    %cst_73 = arith.constant dense<0.000000e+00> : vector<8xf32>
    %162 = vector.multi_reduction <add>, %161, %cst_73 [1] : vector<8x8xf32> to vector<8xf32>
    %163 = vector.shape_cast %162 : vector<8xf32> to vector<8x1xf32>
    %164 = vector.broadcast %163 : vector<8x1xf32> to vector<8x8xf32>
    %165 = arith.divf %161, %164 : vector<8x8xf32>
    %cst_74 = arith.constant dense<0.000000e+00> : vector<8x16xf32>
    %166 = tpu.matmul %165, %149, %cst_74 {dimension_numbers = #tpu.dot_dimension_numbers<[1], [0], [0], [1], [0, 0, 1, 1], [], []>} : vector<8x8xf32>, vector<8x16xf32>, vector<8x16xf32> -> vector<8x16xf32>
    %167 = vector.extract_strided_slice %146 {offsets = [0, 16], sizes = [8, 16], strides = [1, 1]} : vector<8x96xf32> to vector<8x16xf32>
    %168 = vector.extract_strided_slice %146 {offsets = [0, 48], sizes = [8, 16], strides = [1, 1]} : vector<8x96xf32> to vector<8x16xf32>
    %169 = vector.extract_strided_slice %146 {offsets = [0, 80], sizes = [8, 16], strides = [1, 1]} : vector<8x96xf32> to vector<8x16xf32>
    %cst_75 = arith.constant dense<0.000000e+00> : vector<8x8xf32>
    %170 = tpu.matmul %167, %168, %cst_75 {dimension_numbers = #tpu.dot_dimension_numbers<[1], [1], [0], [0], [0, 0, 1, 0], [], []>} : vector<8x16xf32>, vector<8x16xf32>, vector<8x8xf32> -> vector<8x8xf32>
    %cst_76 = arith.constant 0.000000e+00 : f32
    %171 = vector.broadcast %cst_76 : f32 to vector<8x8xf32>
    %172 = arith.select %4, %170, %171 : vector<8x8xi1>, vector<8x8xf32>
    %cst_77 = arith.constant 0.000000e+00 : f32
    %173 = vector.broadcast %cst_77 : f32 to vector<8x8xf32>
    %174 = arith.cmpf oeq, %172, %173 : vector<8x8xf32>
    %cst_78 = arith.constant 0xFF800000 : f32
    %175 = vector.broadcast %cst_78 : f32 to vector<8x8xf32>
    %176 = arith.select %174, %175, %172 : vector<8x8xi1>, vector<8x8xf32>
    %cst_79 = arith.constant dense<0xFF800000> : vector<8xf32>
    %177 = vector.multi_reduction <maximumf>, %176, %cst_79 [1] : vector<8x8xf32> to vector<8xf32>
    %178 = vector.shape_cast %177 : vector<8xf32> to vector<8x1xf32>
    %179 = vector.broadcast %178 : vector<8x1xf32> to vector<8x8xf32>
    %180 = arith.subf %176, %179 : vector<8x8xf32>
    %181 = math.exp %180 : vector<8x8xf32>
    %cst_80 = arith.constant dense<0.000000e+00> : vector<8xf32>
    %182 = vector.multi_reduction <add>, %181, %cst_80 [1] : vector<8x8xf32> to vector<8xf32>
    %183 = vector.shape_cast %182 : vector<8xf32> to vector<8x1xf32>
    %184 = vector.broadcast %183 : vector<8x1xf32> to vector<8x8xf32>
    %185 = arith.divf %181, %184 : vector<8x8xf32>
    %cst_81 = arith.constant dense<0.000000e+00> : vector<8x16xf32>
    %186 = tpu.matmul %185, %169, %cst_81 {dimension_numbers = #tpu.dot_dimension_numbers<[1], [0], [0], [1], [0, 0, 1, 1], [], []>} : vector<8x8xf32>, vector<8x16xf32>, vector<8x16xf32> -> vector<8x16xf32>
    %187 = tpu.concatenate %166, %186 in 1 : vector<8x16xf32>, vector<8x16xf32> -> vector<8x32xf32>
    %c0_82 = arith.constant 0 : index
    %c0_83 = arith.constant 0 : index
    %188 = vector.load %arg4[%c0_82, %c0_83] : memref<32x32xf32, #tpu.memory_space<vmem>>, vector<32x32xf32>
    %cst_84 = arith.constant dense<0.000000e+00> : vector<8x32xf32>
    %189 = tpu.matmul %187, %188, %cst_84 {dimension_numbers = #tpu.dot_dimension_numbers<[1], [0], [0], [1], [0, 0, 1, 1], [], []>} : vector<8x32xf32>, vector<32x32xf32>, vector<8x32xf32> -> vector<8x32xf32>
    %c0_85 = arith.constant 0 : index
    %c0_86 = arith.constant 0 : index
    %190 = vector.load %arg5[%c0_85, %c0_86] : memref<1x32xf32, #tpu.memory_space<vmem>>, vector<1x32xf32>
    %191 = vector.broadcast %190 : vector<1x32xf32> to vector<8x32xf32>
    %192 = arith.addf %189, %191 : vector<8x32xf32>
    %193 = arith.addf %117, %192 : vector<8x32xf32>
    %c0_87 = arith.constant 0 : index
    %c0_88 = arith.constant 0 : index
    %194 = vector.load %arg8[%c0_87, %c0_88] : memref<1x32xf32, #tpu.memory_space<vmem>>, vector<1x32xf32>
    %c0_89 = arith.constant 0 : index
    %c0_90 = arith.constant 0 : index
    %195 = vector.load %arg9[%c0_89, %c0_90] : memref<1x32xf32, #tpu.memory_space<vmem>>, vector<1x32xf32>
    %cst_91 = arith.constant dense<0.000000e+00> : vector<8xf32>
    %196 = vector.multi_reduction <add>, %193, %cst_91 [1] : vector<8x32xf32> to vector<8xf32>
    %197 = vector.shape_cast %196 : vector<8xf32> to vector<8x1xf32>
    %cst_92 = arith.constant 3.200000e+01 : f32
    %198 = vector.broadcast %cst_92 : f32 to vector<8x1xf32>
    %199 = arith.divf %197, %198 : vector<8x1xf32>
    %200 = vector.broadcast %199 : vector<8x1xf32> to vector<8x32xf32>
    %201 = arith.subf %193, %200 : vector<8x32xf32>
    %202 = arith.mulf %201, %201 : vector<8x32xf32>
    %cst_93 = arith.constant dense<0.000000e+00> : vector<8xf32>
    %203 = vector.multi_reduction <add>, %202, %cst_93 [1] : vector<8x32xf32> to vector<8xf32>
    %204 = vector.shape_cast %203 : vector<8xf32> to vector<8x1xf32>
    %cst_94 = arith.constant 3.200000e+01 : f32
    %205 = vector.broadcast %cst_94 : f32 to vector<8x1xf32>
    %206 = arith.divf %204, %205 : vector<8x1xf32>
    %cst_95 = arith.constant 9.99999974E-6 : f32
    %207 = vector.broadcast %cst_95 : f32 to vector<8x1xf32>
    %208 = arith.addf %206, %207 : vector<8x1xf32>
    %209 = math.rsqrt %208 : vector<8x1xf32>
    %210 = vector.broadcast %199 : vector<8x1xf32> to vector<8x32xf32>
    %211 = arith.subf %193, %210 : vector<8x32xf32>
    %212 = vector.broadcast %209 : vector<8x1xf32> to vector<8x32xf32>
    %213 = arith.mulf %211, %212 : vector<8x32xf32>
    %214 = vector.broadcast %194 : vector<1x32xf32> to vector<8x32xf32>
    %215 = arith.mulf %213, %214 : vector<8x32xf32>
    %216 = vector.broadcast %195 : vector<1x32xf32> to vector<8x32xf32>
    %217 = arith.addf %215, %216 : vector<8x32xf32>
    %c0_96 = arith.constant 0 : index
    %c0_97 = arith.constant 0 : index
    %218 = vector.load %arg10[%c0_96, %c0_97] : memref<32x128xf32, #tpu.memory_space<vmem>>, vector<32x128xf32>
    %cst_98 = arith.constant dense<0.000000e+00> : vector<8x128xf32>
    %219 = tpu.matmul %217, %218, %cst_98 {dimension_numbers = #tpu.dot_dimension_numbers<[1], [0], [0], [1], [0, 0, 1, 1], [], []>} : vector<8x32xf32>, vector<32x128xf32>, vector<8x128xf32> -> vector<8x128xf32>
    %c0_99 = arith.constant 0 : index
    %c0_100 = arith.constant 0 : index
    %220 = vector.load %arg11[%c0_99, %c0_100] : memref<1x128xf32, #tpu.memory_space<vmem>>, vector<1x128xf32>
    %221 = vector.broadcast %220 : vector<1x128xf32> to vector<8x128xf32>
    %222 = arith.addf %219, %221 : vector<8x128xf32>
    %cst_101 = arith.constant 0.000000e+00 : f32
    %223 = vector.broadcast %cst_101 : f32 to vector<8x128xf32>
    %224 = arith.maximumf %222, %223 : vector<8x128xf32>
    %c0_102 = arith.constant 0 : index
    %c0_103 = arith.constant 0 : index
    %225 = vector.load %arg12[%c0_102, %c0_103] : memref<128x32xf32, #tpu.memory_space<vmem>>, vector<128x32xf32>
    %cst_104 = arith.constant dense<0.000000e+00> : vector<8x32xf32>
    %226 = tpu.matmul %224, %225, %cst_104 {dimension_numbers = #tpu.dot_dimension_numbers<[1], [0], [0], [1], [0, 0, 1, 1], [], []>} : vector<8x128xf32>, vector<128x32xf32>, vector<8x32xf32> -> vector<8x32xf32>
    %c0_105 = arith.constant 0 : index
    %c0_106 = arith.constant 0 : index
    %227 = vector.load %arg13[%c0_105, %c0_106] : memref<1x32xf32, #tpu.memory_space<vmem>>, vector<1x32xf32>
    %228 = vector.broadcast %227 : vector<1x32xf32> to vector<8x32xf32>
    %229 = arith.addf %226, %228 : vector<8x32xf32>
    %230 = arith.addf %193, %229 : vector<8x32xf32>
    %c0_107 = arith.constant 0 : index
    %c0_108 = arith.constant 0 : index
    %231 = vector.load %arg14[%c0_107, %c0_108] : memref<1x32xf32, #tpu.memory_space<vmem>>, vector<1x32xf32>
    %c0_109 = arith.constant 0 : index
    %c0_110 = arith.constant 0 : index
    %232 = vector.load %arg15[%c0_109, %c0_110] : memref<1x32xf32, #tpu.memory_space<vmem>>, vector<1x32xf32>
    %cst_111 = arith.constant dense<0.000000e+00> : vector<8xf32>
    %233 = vector.multi_reduction <add>, %230, %cst_111 [1] : vector<8x32xf32> to vector<8xf32>
    %234 = vector.shape_cast %233 : vector<8xf32> to vector<8x1xf32>
    %cst_112 = arith.constant 3.200000e+01 : f32
    %235 = vector.broadcast %cst_112 : f32 to vector<8x1xf32>
    %236 = arith.divf %234, %235 : vector<8x1xf32>
    %237 = vector.broadcast %236 : vector<8x1xf32> to vector<8x32xf32>
    %238 = arith.subf %230, %237 : vector<8x32xf32>
    %239 = arith.mulf %238, %238 : vector<8x32xf32>
    %cst_113 = arith.constant dense<0.000000e+00> : vector<8xf32>
    %240 = vector.multi_reduction <add>, %239, %cst_113 [1] : vector<8x32xf32> to vector<8xf32>
    %241 = vector.shape_cast %240 : vector<8xf32> to vector<8x1xf32>
    %cst_114 = arith.constant 3.200000e+01 : f32
    %242 = vector.broadcast %cst_114 : f32 to vector<8x1xf32>
    %243 = arith.divf %241, %242 : vector<8x1xf32>
    %cst_115 = arith.constant 9.99999974E-6 : f32
    %244 = vector.broadcast %cst_115 : f32 to vector<8x1xf32>
    %245 = arith.addf %243, %244 : vector<8x1xf32>
    %246 = math.rsqrt %245 : vector<8x1xf32>
    %247 = vector.broadcast %236 : vector<8x1xf32> to vector<8x32xf32>
    %248 = arith.subf %230, %247 : vector<8x32xf32>
    %249 = vector.broadcast %246 : vector<8x1xf32> to vector<8x32xf32>
    %250 = arith.mulf %248, %249 : vector<8x32xf32>
    %251 = vector.broadcast %231 : vector<1x32xf32> to vector<8x32xf32>
    %252 = arith.mulf %250, %251 : vector<8x32xf32>
    %253 = vector.broadcast %232 : vector<1x32xf32> to vector<8x32xf32>
    %254 = arith.addf %252, %253 : vector<8x32xf32>
    %c0_116 = arith.constant 0 : index
    %c0_117 = arith.constant 0 : index
    %255 = vector.load %arg16[%c0_116, %c0_117] : memref<32x128xf32, #tpu.memory_space<vmem>>, vector<32x128xf32>
    %cst_118 = arith.constant dense<0.000000e+00> : vector<8x128xf32>
    %256 = tpu.matmul %254, %255, %cst_118 {dimension_numbers = #tpu.dot_dimension_numbers<[1], [0], [0], [1], [0, 0, 1, 1], [], []>} : vector<8x32xf32>, vector<32x128xf32>, vector<8x128xf32> -> vector<8x128xf32>
    %c0_119 = arith.constant 0 : index
    %c0_120 = arith.constant 0 : index
    %257 = vector.load %arg17[%c0_119, %c0_120] : memref<1x128xf32, #tpu.memory_space<vmem>>, vector<1x128xf32>
    %258 = vector.broadcast %257 : vector<1x128xf32> to vector<8x128xf32>
    %259 = arith.addf %256, %258 : vector<8x128xf32>
    %c0_121 = arith.constant 0 : index
    %c0_122 = arith.constant 0 : index
    %c0_123 = arith.constant 0 : index
    %260 = vector.load %arg18[%c0_121, %c0_122, %c0_123] : memref<1x8x128xf32, #tpu.memory_space<vmem>>, vector<1x8x128xf32>
    %261 = vector.shape_cast %260 : vector<1x8x128xf32> to vector<8x128xf32>
    %262 = vector.shape_cast %259 : vector<8x128xf32> to vector<1x8x128xf32>
    tpu.vector_store %arg18[%c0_121, %c0_122, %c0_123], %262 {strides = array<i32>} : memref<1x8x128xf32, #tpu.memory_space<vmem>>, vector<1x8x128xf32>,
    return
  }
  func.func @transform_0(%arg0: i32) -> (i32, i32, i32) {
    %c0_i32 = arith.constant 0 : i32
    %c0_i32_0 = arith.constant 0 : i32
    %c0_i32_1 = arith.constant 0 : i32
    return %arg0, %c0_i32, %c0_i32_0 : i32, i32, i32
  }
  func.func @transform_1(%arg0: i32) -> (i32, i32) {
    %c0_i32 = arith.constant 0 : i32
    %c0_i32_0 = arith.constant 0 : i32
    %c0_i32_1 = arith.constant 0 : i32
    return %c0_i32, %c0_i32_0 : i32, i32
  }
  func.func @transform_2(%arg0: i32) -> (i32, i32) {
    %c0_i32 = arith.constant 0 : i32
    %c0_i32_0 = arith.constant 0 : i32
    %c0_i32_1 = arith.constant 0 : i32
    return %c0_i32, %c0_i32_0 : i32, i32
  }
  func.func @transform_3(%arg0: i32) -> (i32, i32) {
    %c0_i32 = arith.constant 0 : i32
    %c0_i32_0 = arith.constant 0 : i32
    %c0_i32_1 = arith.constant 0 : i32
    return %c0_i32, %c0_i32_0 : i32, i32
  }
  func.func @transform_4(%arg0: i32) -> (i32, i32) {
    %c0_i32 = arith.constant 0 : i32
    %c0_i32_0 = arith.constant 0 : i32
    %c0_i32_1 = arith.constant 0 : i32
    return %c0_i32, %c0_i32_0 : i32, i32
  }
  func.func @transform_5(%arg0: i32) -> (i32, i32) {
    %c0_i32 = arith.constant 0 : i32
    %c0_i32_0 = arith.constant 0 : i32
    %c0_i32_1 = arith.constant 0 : i32
    return %c0_i32, %c0_i32_0 : i32, i32
  }
  func.func @transform_6(%arg0: i32) -> (i32, i32) {
    %c0_i32 = arith.constant 0 : i32
    %c0_i32_0 = arith.constant 0 : i32
    %c0_i32_1 = arith.constant 0 : i32
    return %c0_i32, %c0_i32_0 : i32, i32
  }
  func.func @transform_7(%arg0: i32) -> (i32, i32) {
    %c0_i32 = arith.constant 0 : i32
    %c0_i32_0 = arith.constant 0 : i32
    %c0_i32_1 = arith.constant 0 : i32
    return %c0_i32, %c0_i32_0 : i32, i32
  }
  func.func @transform_8(%arg0: i32) -> (i32, i32) {
    %c0_i32 = arith.constant 0 : i32
    %c0_i32_0 = arith.constant 0 : i32
    %c0_i32_1 = arith.constant 0 : i32
    return %c0_i32, %c0_i32_0 : i32, i32
  }
  func.func @transform_9(%arg0: i32) -> (i32, i32) {
    %c0_i32 = arith.constant 0 : i32
    %c0_i32_0 = arith.constant 0 : i32
    %c0_i32_1 = arith.constant 0 : i32
    return %c0_i32, %c0_i32_0 : i32, i32
  }
  func.func @transform_10(%arg0: i32) -> (i32, i32) {
    %c0_i32 = arith.constant 0 : i32
    %c0_i32_0 = arith.constant 0 : i32
    %c0_i32_1 = arith.constant 0 : i32
    return %c0_i32, %c0_i32_0 : i32, i32
  }
  func.func @transform_11(%arg0: i32) -> (i32, i32) {
    %c0_i32 = arith.constant 0 : i32
    %c0_i32_0 = arith.constant 0 : i32
    %c0_i32_1 = arith.constant 0 : i32
    return %c0_i32, %c0_i32_0 : i32, i32
  }
  func.func @transform_12(%arg0: i32) -> (i32, i32) {
    %c0_i32 = arith.constant 0 : i32
    %c0_i32_0 = arith.constant 0 : i32
    %c0_i32_1 = arith.constant 0 : i32
    return %c0_i32, %c0_i32_0 : i32, i32
  }
  func.func @transform_13(%arg0: i32) -> (i32, i32) {
    %c0_i32 = arith.constant 0 : i32
    %c0_i32_0 = arith.constant 0 : i32
    %c0_i32_1 = arith.constant 0 : i32
    return %c0_i32, %c0_i32_0 : i32, i32
  }
  func.func @transform_14(%arg0: i32) -> (i32, i32) {
    %c0_i32 = arith.constant 0 : i32
    %c0_i32_0 = arith.constant 0 : i32
    %c0_i32_1 = arith.constant 0 : i32
    return %c0_i32, %c0_i32_0 : i32, i32
  }
  func.func @transform_15(%arg0: i32) -> (i32, i32) {
    %c0_i32 = arith.constant 0 : i32
    %c0_i32_0 = arith.constant 0 : i32
    %c0_i32_1 = arith.constant 0 : i32
    return %c0_i32, %c0_i32_0 : i32, i32
  }
  func.func @transform_16(%arg0: i32) -> (i32, i32) {
    %c0_i32 = arith.constant 0 : i32
    %c0_i32_0 = arith.constant 0 : i32
    %c0_i32_1 = arith.constant 0 : i32
    return %c0_i32, %c0_i32_0 : i32, i32
  }
  func.func @transform_17(%arg0: i32) -> (i32, i32, i32) {
    %c0_i32 = arith.constant 0 : i32
    %c0_i32_0 = arith.constant 0 : i32
    %c0_i32_1 = arith.constant 0 : i32
    return %arg0, %c0_i32, %c0_i32_0 : i32, i32, i32
  }
}

</mosaic_0001>

<llo_original>
// kernel: _lambda_.1
$region0: #{_lambda_.1}
  #allocation0 [shape = 'u32[]', space=smem, size = 0x4, offset = 0x4, fixed_abs, tag = 'smem constant byte address 0x4 - core index']
  #allocation1 [shape = 'u32[144,128]{1,0:T(1,128)}', space=vmem, size = 0x12000, scoped, tag = 'internal scratch']
  %s0 = inlined_call_operand.vmem [shape: f32[2,8,32], index: 0, kind: input, shape index: {}]
  %s1 = inlined_call_operand.vmem [shape: f32[32,96], index: 1, kind: input, shape index: {}]
  %s2 = inlined_call_operand.vmem [shape: f32[1,96], index: 2, kind: input, shape index: {}]
  %s3 = inlined_call_operand.vmem [shape: f32[32,32], index: 3, kind: input, shape index: {}]
  %s4 = inlined_call_operand.vmem [shape: f32[1,32], index: 4, kind: input, shape index: {}]
  %s5 = inlined_call_operand.vmem [shape: f32[1,32], index: 5, kind: input, shape index: {}, may-alias: {5,7,13}]
  %s6 = inlined_call_operand.vmem [shape: f32[1,32], index: 6, kind: input, shape index: {}, may-alias: {6,8,14}]
  %s7 = inlined_call_operand.vmem [shape: f32[1,32], index: 7, kind: input, shape index: {}, may-alias: {5,7,13}]
  %s8 = inlined_call_operand.vmem [shape: f32[1,32], index: 8, kind: input, shape index: {}, may-alias: {6,8,14}]
  %s9 = inlined_call_operand.vmem [shape: f32[32,128], index: 9, kind: input, shape index: {}]
  %s10 = inlined_call_operand.vmem [shape: f32[1,128], index: 10, kind: input, shape index: {}]
  %s11 = inlined_call_operand.vmem [shape: f32[128,32], index: 11, kind: input, shape index: {}]
  %s12 = inlined_call_operand.vmem [shape: f32[1,32], index: 12, kind: input, shape index: {}]
  %s13 = inlined_call_operand.vmem [shape: f32[1,32], index: 13, kind: input, shape index: {}, may-alias: {5,7,13}]
  %s14 = inlined_call_operand.vmem [shape: f32[1,32], index: 14, kind: input, shape index: {}, may-alias: {6,8,14}]
  %s15 = inlined_call_operand.hbm [shape: f32[32,128], index: 15, kind: input, shape index: {}]
  %s16 = inlined_call_operand.vmem [shape: f32[1,128], index: 16, kind: input, shape index: {}]
  %s17 = inlined_call_operand.hbm [shape: f32[2,8,128], index: 17, kind: output, shape index: {}]
  %s18 = sld [smem:[#allocation0]]
  $region105: #{_lambda_.1} parent=0
    _
  %s20 = ssub.s32 1, %s18
  %s21 = scalar_select 0, %s20, %s18
  $region1: #{_lambda_.1} parent=0
    #allocation2 [shape = 'u8[16384]{0}', space=vmem, size = 0x4000, scoped, tag = 'input window, operand 15, single buffered']
    #allocation3 [shape = 's32[2]{0}', space=sflag, size = 0x8, scoped, tag = 'scoped memory for _lambda_.1']
    #allocation4 [shape = 's32[2]{0}', space=sflag, size = 0x8, scoped, tag = 'scoped memory for _lambda_.1']
    #allocation5 [shape = 'u8[8192]{0}', space=vmem, size = 0x2000, scoped, tag = 'output window, operand 0']
    %22 = vsyncpa [#allocation3], 0
    %23 = vsyncpa [#allocation4], 0
    %s24 = scalar_lea.sflag [#allocation4], 1
    %25 = vsyncpa %s24, 0
    loop: start=0, step=1, limit=4
    $region2: #{_lambda_.1} parent=1 // loop_pre_header
      _
    $region3: #{_lambda_.1} parent=1 // loop_header
      %s27 = sphi 0, %s31
      %p28 = scmp.ge.s32.totalorder %s27, 4
      %s37 = sphi 0, %s39
      %s40 = sphi 0, %s37
      %s41 = sphi 0, %s40
      %s57 = sphi 0, %s41
      %s61 = sphi 0, %s61
      %s63 = sphi 0, %s61
      %s64 = sphi 0, %s63
      %s78 = sphi 0, %s64
      %s82 = sphi 0, %s82
      %s84 = sphi 0, %s82
      %s85 = sphi 0, %s84
      %s99 = sphi 0, %s85
      %s103 = sphi 0, %s103
      %s105 = sphi 0, %s103
      %s106 = sphi 0, %s105
      %s120 = sphi 0, %s106
      %s124 = sphi 0, %s124
      %s126 = sphi 0, %s124
      %s127 = sphi 0, %s126
      %s141 = sphi 0, %s127
      %s145 = sphi 0, %s145
      %s147 = sphi 0, %s145
      %s148 = sphi 0, %s147
      %s162 = sphi 0, %s148
      %s166 = sphi 0, %s166
      %s168 = sphi 0, %s166
      %s169 = sphi 0, %s168
      %s183 = sphi 0, %s169
      %s187 = sphi 0, %s187
      %s189 = sphi 0, %s187
      %s190 = sphi 0, %s189
      %s204 = sphi 0, %s190
      %s208 = sphi 0, %s208
      %s210 = sphi 0, %s208
      %s211 = sphi 0, %s210
      %s225 = sphi 0, %s211
      %s229 = sphi 0, %s229
      %s231 = sphi 0, %s229
      %s232 = sphi 0, %s231
      %s246 = sphi 0, %s232
      %s250 = sphi 0, %s250
      %s252 = sphi 0, %s250
      %s253 = sphi 0, %s252
      %s267 = sphi 0, %s253
      %s271 = sphi 0, %s271
      %s273 = sphi 0, %s271
      %s274 = sphi 0, %s273
      %s288 = sphi 0, %s274
      %s292 = sphi 0, %s292
      %s294 = sphi 0, %s292
      %s295 = sphi 0, %s294
      %s309 = sphi 0, %s295
      %s313 = sphi 0, %s313
      %s315 = sphi 0, %s313
      %s316 = sphi 0, %s315
      %s330 = sphi 0, %s316
      %s334 = sphi 0, %s334
      %s336 = sphi 0, %s334
      %s337 = sphi 0, %s336
      %s351 = sphi 0, %s337
      %s355 = sphi 0, %s355
      %s357 = sphi 0, %s355
      %s358 = sphi 0, %s357
      %s372 = sphi 0, %s358
      %s376 = sphi 0, %s376
      %s378 = sphi 0, %s376
      %s379 = sphi 0, %s378
      %s393 = sphi 0, %s379
      %s399 = sphi 0, %s401
      %s402 = sphi 0, %s399
      %s403 = sphi 0, %s402
      %s419 = sphi 0, %s403
    $region4: #{_lambda_.1} parent=1 // loop_header_branch
      %30 = sbr.rel (%p28) target = $region8
    $region5: #{_lambda_.1} parent=1 // loop_body
      %s32 = ssub.s32 %s27, 1
      %s33 = ssub.s32 %s27, 2
      %s34 = sadd.s32 %s27, 1
      %s35 = ssub.s32 %s27, %s34
      %p36 = scmp.eq.s32.totalorder %s35, 0
      %s38 = sadd.s32 %s37, 1
      %s39 = scalar_select %p36, %s37, %s38
      %p42 = pneg %p36
      %p43 = scmp.eq.s32.totalorder %s27, 1
      %p44 = por %p42, %p43
      %p45 = scmp.ne.s32.totalorder %s37, %s40
      %p46 = scmp.eq.s32.totalorder %s27, 0
      %p47 = por %p45, %p46
      %p48 = scmp.ne.s32.totalorder %s37, %s40
      %p49 = scmp.eq.s32.totalorder %s32, 1
      %p50 = por %p48, %p49
      %p51 = scmp.ne.s32.totalorder %s40, %s41
      %p52 = scmp.eq.s32.totalorder %s32, 0
      %p53 = por %p51, %p52
      %p54 = scmp.ne.s32.totalorder %s40, %s41
      %p55 = scmp.eq.s32.totalorder %s33, 1
      %p56 = por %p54, %p55
      %p58 = scmp.ne.s32.totalorder %s41, %s57
      %p59 = scmp.eq.s32.totalorder %s33, 0
      %p60 = por %p58, %p59
      %s62 = sadd.s32 %s61, 1
      %p65 = scmp.eq.s32.totalorder %s27, 1
      %p66 = scmp.ne.s32.totalorder %s61, %s63
      %p67 = scmp.eq.s32.totalorder %s27, 0
      %p68 = por %p66, %p67
      %p69 = scmp.ne.s32.totalorder %s61, %s63
      %p70 = scmp.eq.s32.totalorder %s32, 1
      %p71 = por %p69, %p70
      %p72 = scmp.ne.s32.totalorder %s63, %s64
      %p73 = scmp.eq.s32.totalorder %s32, 0
      %p74 = por %p72, %p73
      %p75 = scmp.ne.s32.totalorder %s63, %s64
      %p76 = scmp.eq.s32.totalorder %s33, 1
      %p77 = por %p75, %p76
      %p79 = scmp.ne.s32.totalorder %s64, %s78
      %p80 = scmp.eq.s32.totalorder %s33, 0
      %p81 = por %p79, %p80
      %s83 = sadd.s32 %s82, 1
      %p86 = scmp.eq.s32.totalorder %s27, 1
      %p87 = scmp.ne.s32.totalorder %s82, %s84
      %p88 = scmp.eq.s32.totalorder %s27, 0
      %p89 = por %p87, %p88
      %p90 = scmp.ne.s32.totalorder %s82, %s84
      %p91 = scmp.eq.s32.totalorder %s32, 1
      %p92 = por %p90, %p91
      %p93 = scmp.ne.s32.totalorder %s84, %s85
      %p94 = scmp.eq.s32.totalorder %s32, 0
      %p95 = por %p93, %p94
      %p96 = scmp.ne.s32.totalorder %s84, %s85
      %p97 = scmp.eq.s32.totalorder %s33, 1
      %p98 = por %p96, %p97
      %p100 = scmp.ne.s32.totalorder %s85, %s99
      %p101 = scmp.eq.s32.totalorder %s33, 0
      %p102 = por %p100, %p101
      %s104 = sadd.s32 %s103, 1
      %p107 = scmp.eq.s32.totalorder %s27, 1
      %p108 = scmp.ne.s32.totalorder %s103, %s105
      %p109 = scmp.eq.s32.totalorder %s27, 0
      %p110 = por %p108, %p109
      %p111 = scmp.ne.s32.totalorder %s103, %s105
      %p112 = scmp.eq.s32.totalorder %s32, 1
      %p113 = por %p111, %p112
      %p114 = scmp.ne.s32.totalorder %s105, %s106
      %p115 = scmp.eq.s32.totalorder %s32, 0
      %p116 = por %p114, %p115
      %p117 = scmp.ne.s32.totalorder %s105, %s106
      %p118 = scmp.eq.s32.totalorder %s33, 1
      %p119 = por %p117, %p118
      %p121 = scmp.ne.s32.totalorder %s106, %s120
      %p122 = scmp.eq.s32.totalorder %s33, 0
      %p123 = por %p121, %p122
      %s125 = sadd.s32 %s124, 1
      %p128 = scmp.eq.s32.totalorder %s27, 1
      %p129 = scmp.ne.s32.totalorder %s124, %s126
      %p130 = scmp.eq.s32.totalorder %s27, 0
      %p131 = por %p129, %p130
      %p132 = scmp.ne.s32.totalorder %s124, %s126
      %p133 = scmp.eq.s32.totalorder %s32, 1
      %p134 = por %p132, %p133
      %p135 = scmp.ne.s32.totalorder %s126, %s127
      %p136 = scmp.eq.s32.totalorder %s32, 0
      %p137 = por %p135, %p136
      %p138 = scmp.ne.s32.totalorder %s126, %s127
      %p139 = scmp.eq.s32.totalorder %s33, 1
      %p140 = por %p138, %p139
      %p142 = scmp.ne.s32.totalorder %s127, %s141
      %p143 = scmp.eq.s32.totalorder %s33, 0
      %p144 = por %p142, %p143
      %s146 = sadd.s32 %s145, 1
      %p149 = scmp.eq.s32.totalorder %s27, 1
      %p150 = scmp.ne.s32.totalorder %s145, %s147
      %p151 = scmp.eq.s32.totalorder %s27, 0
      %p152 = por %p150, %p151
      %p153 = scmp.ne.s32.totalorder %s145, %s147
      %p154 = scmp.eq.s32.totalorder %s32, 1
      %p155 = por %p153, %p154
      %p156 = scmp.ne.s32.totalorder %s147, %s148
      %p157 = scmp.eq.s32.totalorder %s32, 0
      %p158 = por %p156, %p157
      %p159 = scmp.ne.s32.totalorder %s147, %s148
      %p160 = scmp.eq.s32.totalorder %s33, 1
      %p161 = por %p159, %p160
      %p163 = scmp.ne.s32.totalorder %s148, %s162
      %p164 = scmp.eq.s32.totalorder %s33, 0
      %p165 = por %p163, %p164
      %s167 = sadd.s32 %s166, 1
      %p170 = scmp.eq.s32.totalorder %s27, 1
      %p171 = scmp.ne.s32.totalorder %s166, %s168
      %p172 = scmp.eq.s32.totalorder %s27, 0
      %p173 = por %p171, %p172
      %p174 = scmp.ne.s32.totalorder %s166, %s168
      %p175 = scmp.eq.s32.totalorder %s32, 1
      %p176 = por %p174, %p175
      %p177 = scmp.ne.s32.totalorder %s168, %s169
      %p178 = scmp.eq.s32.totalorder %s32, 0
      %p179 = por %p177, %p178
      %p180 = scmp.ne.s32.totalorder %s168, %s169
      %p181 = scmp.eq.s32.totalorder %s33, 1
      %p182 = por %p180, %p181
      %p184 = scmp.ne.s32.totalorder %s169, %s183
      %p185 = scmp.eq.s32.totalorder %s33, 0
      %p186 = por %p184, %p185
      %s188 = sadd.s32 %s187, 1
      %p191 = scmp.eq.s32.totalorder %s27, 1
      %p192 = scmp.ne.s32.totalorder %s187, %s189
      %p193 = scmp.eq.s32.totalorder %s27, 0
      %p194 = por %p192, %p193
      %p195 = scmp.ne.s32.totalorder %s187, %s189
      %p196 = scmp.eq.s32.totalorder %s32, 1
      %p197 = por %p195, %p196
      %p198 = scmp.ne.s32.totalorder %s189, %s190
      %p199 = scmp.eq.s32.totalorder %s32, 0
      %p200 = por %p198, %p199
      %p201 = scmp.ne.s32.totalorder %s189, %s190
      %p202 = scmp.eq.s32.totalorder %s33, 1
      %p203 = por %p201, %p202
      %p205 = scmp.ne.s32.totalorder %s190, %s204
      %p206 = scmp.eq.s32.totalorder %s33, 0
      %p207 = por %p205, %p206
      %s209 = sadd.s32 %s208, 1
      %p212 = scmp.eq.s32.totalorder %s27, 1
      %p213 = scmp.ne.s32.totalorder %s208, %s210
      %p214 = scmp.eq.s32.totalorder %s27, 0
      %p215 = por %p213, %p214
      %p216 = scmp.ne.s32.totalorder %s208, %s210
      %p217 = scmp.eq.s32.totalorder %s32, 1
      %p218 = por %p216, %p217
      %p219 = scmp.ne.s32.totalorder %s210, %s211
      %p220 = scmp.eq.s32.totalorder %s32, 0
      %p221 = por %p219, %p220
      %p222 = scmp.ne.s32.totalorder %s210, %s211
      %p223 = scmp.eq.s32.totalorder %s33, 1
      %p224 = por %p222, %p223
      %p226 = scmp.ne.s32.totalorder %s211, %s225
      %p227 = scmp.eq.s32.totalorder %s33, 0
      %p228 = por %p226, %p227
      %s230 = sadd.s32 %s229, 1
      %p233 = scmp.eq.s32.totalorder %s27, 1
      %p234 = scmp.ne.s32.totalorder %s229, %s231
      %p235 = scmp.eq.s32.totalorder %s27, 0
      %p236 = por %p234, %p235
      %p237 = scmp.ne.s32.totalorder %s229, %s231
      %p238 = scmp.eq.s32.totalorder %s32, 1
      %p239 = por %p237, %p238
      %p240 = scmp.ne.s32.totalorder %s231, %s232
      %p241 = scmp.eq.s32.totalorder %s32, 0
      %p242 = por %p240, %p241
      %p243 = scmp.ne.s32.totalorder %s231, %s232
      %p244 = scmp.eq.s32.totalorder %s33, 1
      %p245 = por %p243, %p244
      %p247 = scmp.ne.s32.totalorder %s232, %s246
      %p248 = scmp.eq.s32.totalorder %s33, 0
      %p249 = por %p247, %p248
      %s251 = sadd.s32 %s250, 1
      %p254 = scmp.eq.s32.totalorder %s27, 1
      %p255 = scmp.ne.s32.totalorder %s250, %s252
      %p256 = scmp.eq.s32.totalorder %s27, 0
      %p257 = por %p255, %p256
      %p258 = scmp.ne.s32.totalorder %s250, %s252
      %p259 = scmp.eq.s32.totalorder %s32, 1
      %p260 = por %p258, %p259
      %p261 = scmp.ne.s32.totalorder %s252, %s253
      %p262 = scmp.eq.s32.totalorder %s32, 0
      %p263 = por %p261, %p262
      %p264 = scmp.ne.s32.totalorder %s252, %s253
      %p265 = scmp.eq.s32.totalorder %s33, 1
      %p266 = por %p264, %p265
      %p268 = scmp.ne.s32.totalorder %s253, %s267
      %p269 = scmp.eq.s32.totalorder %s33, 0
      %p270 = por %p268, %p269
      %s272 = sadd.s32 %s271, 1
      %p275 = scmp.eq.s32.totalorder %s27, 1
      %p276 = scmp.ne.s32.totalorder %s271, %s273
      %p277 = scmp.eq.s32.totalorder %s27, 0
      %p278 = por %p276, %p277
      %p279 = scmp.ne.s32.totalorder %s271, %s273
      %p280 = scmp.eq.s32.totalorder %s32, 1
      %p281 = por %p279, %p280
      %p282 = scmp.ne.s32.totalorder %s273, %s274
      %p283 = scmp.eq.s32.totalorder %s32, 0
      %p284 = por %p282, %p283
      %p285 = scmp.ne.s32.totalorder %s273, %s274
      %p286 = scmp.eq.s32.totalorder %s33, 1
      %p287 = por %p285, %p286
      %p289 = scmp.ne.s32.totalorder %s274, %s288
      %p290 = scmp.eq.s32.totalorder %s33, 0
      %p291 = por %p289, %p290
      %s293 = sadd.s32 %s292, 1
      %p296 = scmp.eq.s32.totalorder %s27, 1
      %p297 = scmp.ne.s32.totalorder %s292, %s294
      %p298 = scmp.eq.s32.totalorder %s27, 0
      %p299 = por %p297, %p298
      %p300 = scmp.ne.s32.totalorder %s292, %s294
      %p301 = scmp.eq.s32.totalorder %s32, 1
      %p302 = por %p300, %p301
      %p303 = scmp.ne.s32.totalorder %s294, %s295
      %p304 = scmp.eq.s32.totalorder %s32, 0
      %p305 = por %p303, %p304
      %p306 = scmp.ne.s32.totalorder %s294, %s295
      %p307 = scmp.eq.s32.totalorder %s33, 1
      %p308 = por %p306, %p307
      %p310 = scmp.ne.s32.totalorder %s295, %s309
      %p311 = scmp.eq.s32.totalorder %s33, 0
      %p312 = por %p310, %p311
      %s314 = sadd.s32 %s313, 1
      %p317 = scmp.eq.s32.totalorder %s27, 1
      %p318 = scmp.ne.s32.totalorder %s313, %s315
      %p319 = scmp.eq.s32.totalorder %s27, 0
      %p320 = por %p318, %p319
      %p321 = scmp.ne.s32.totalorder %s313, %s315
      %p322 = scmp.eq.s32.totalorder %s32, 1
      %p323 = por %p321, %p322
      %p324 = scmp.ne.s32.totalorder %s315, %s316
      %p325 = scmp.eq.s32.totalorder %s32, 0
      %p326 = por %p324, %p325
      %p327 = scmp.ne.s32.totalorder %s315, %s316
      %p328 = scmp.eq.s32.totalorder %s33, 1
      %p329 = por %p327, %p328
      %p331 = scmp.ne.s32.totalorder %s316, %s330
      %p332 = scmp.eq.s32.totalorder %s33, 0
      %p333 = por %p331, %p332
      %s335 = sadd.s32 %s334, 1
      %p338 = scmp.eq.s32.totalorder %s27, 1
      %p339 = scmp.ne.s32.totalorder %s334, %s336
      %p340 = scmp.eq.s32.totalorder %s27, 0
      %p341 = por %p339, %p340
      %p342 = scmp.ne.s32.totalorder %s334, %s336
      %p343 = scmp.eq.s32.totalorder %s32, 1
      %p344 = por %p342, %p343
      %p345 = scmp.ne.s32.totalorder %s336, %s337
      %p346 = scmp.eq.s32.totalorder %s32, 0
      %p347 = por %p345, %p346
      %p348 = scmp.ne.s32.totalorder %s336, %s337
      %p349 = scmp.eq.s32.totalorder %s33, 1
      %p350 = por %p348, %p349
      %p352 = scmp.ne.s32.totalorder %s337, %s351
      %p353 = scmp.eq.s32.totalorder %s33, 0
      %p354 = por %p352, %p353
      %s356 = sadd.s32 %s355, 1
      %p359 = scmp.eq.s32.totalorder %s27, 1
      %p360 = scmp.ne.s32.totalorder %s355, %s357
      %p361 = scmp.eq.s32.totalorder %s27, 0
      %p362 = por %p360, %p361
      %p363 = scmp.ne.s32.totalorder %s355, %s357
      %p364 = scmp.eq.s32.totalorder %s32, 1
      %p365 = por %p363, %p364
      %p366 = scmp.ne.s32.totalorder %s357, %s358
      %p367 = scmp.eq.s32.totalorder %s32, 0
      %p368 = por %p366, %p367
      %p369 = scmp.ne.s32.totalorder %s357, %s358
      %p370 = scmp.eq.s32.totalorder %s33, 1
      %p371 = por %p369, %p370
      %p373 = scmp.ne.s32.totalorder %s358, %s372
      %p374 = scmp.eq.s32.totalorder %s33, 0
      %p375 = por %p373, %p374
      %s377 = sadd.s32 %s376, 1
      %p380 = scmp.eq.s32.totalorder %s27, 1
      %p381 = scmp.ne.s32.totalorder %s376, %s378
      %p382 = scmp.eq.s32.totalorder %s27, 0
      %p383 = por %p381, %p382
      %p384 = scmp.ne.s32.totalorder %s376, %s378
      %p385 = scmp.eq.s32.totalorder %s32, 1
      %p386 = por %p384, %p385
      %p387 = scmp.ne.s32.totalorder %s378, %s379
      %p388 = scmp.eq.s32.totalorder %s32, 0
      %p389 = por %p387, %p388
      %p390 = scmp.ne.s32.totalorder %s378, %s379
      %p391 = scmp.eq.s32.totalorder %s33, 1
      %p392 = por %p390, %p391
      %p394 = scmp.ne.s32.totalorder %s379, %s393
      %p395 = scmp.eq.s32.totalorder %s33, 0
      %p396 = por %p394, %p395
      %s397 = ssub.s32 %s27, %s34
      %p398 = scmp.eq.s32.totalorder %s397, 0
      %s400 = sadd.s32 %s399, 1
      %s401 = scalar_select %p398, %s399, %s400
      %p404 = pneg %p398
      %p405 = scmp.eq.s32.totalorder %s27, 1
      %p406 = por %p404, %p405
      %p407 = scmp.ne.s32.totalorder %s399, %s402
      %p408 = scmp.eq.s32.totalorder %s27, 0
      %p409 = por %p407, %p408
      %p410 = scmp.ne.s32.totalorder %s399, %s402
      %p411 = scmp.eq.s32.totalorder %s32, 1
      %p412 = por %p410, %p411
      %p413 = scmp.ne.s32.totalorder %s402, %s403
      %p414 = scmp.eq.s32.totalorder %s32, 0
      %p415 = por %p413, %p414
      %p416 = scmp.ne.s32.totalorder %s402, %s403
      %p417 = scmp.eq.s32.totalorder %s33, 1
      %p418 = por %p416, %p417
      %p420 = scmp.ne.s32.totalorder %s403, %s419
      %p421 = scmp.eq.s32.totalorder %s33, 0
      %p422 = por %p420, %p421
      %p423 = scmp.le.s32.totalorder 1, %s27
      %p424 = scmp.lt.s32.totalorder %s27, 3
      %p425 = pnand %p423, %p424
      %p426 = pneg %p425
      // Predicated region
      $region9: #{_lambda_.1} parent=5 // pred_check
        _
      $region10: #{_lambda_.1} parent=5 // pred_check_branch
        %428 = sbr.rel (%p425) target = $region12
      $region11: #{_lambda_.1} parent=5 // pred_region
        %s429 = ssub.s32 %s27, 1
        // Predicated region
        $region13: #{_lambda_.1} parent=11 // pred_check
          %p430 = pneg %p74
        $region14: #{_lambda_.1} parent=11 // pred_check_branch
          %432 = sbr.rel (%p430) target = $region16
        $region15: #{_lambda_.1} parent=11 // pred_region
          _
        $region16: #{_lambda_.1} parent=11 // pred_fallthru
          _
        // Predicated region
        $region17: #{_lambda_.1} parent=11 // pred_check
          %p433 = pneg %p95
        $region18: #{_lambda_.1} parent=11 // pred_check_branch
          %435 = sbr.rel (%p433) target = $region20
        $region19: #{_lambda_.1} parent=11 // pred_region
          _
        $region20: #{_lambda_.1} parent=11 // pred_fallthru
          _
        // Predicated region
        $region21: #{_lambda_.1} parent=11 // pred_check
          %p436 = pneg %p116
        $region22: #{_lambda_.1} parent=11 // pred_check_branch
          %438 = sbr.rel (%p436) target = $region24
        $region23: #{_lambda_.1} parent=11 // pred_region
          _
        $region24: #{_lambda_.1} parent=11 // pred_fallthru
          _
        // Predicated region
        $region25: #{_lambda_.1} parent=11 // pred_check
          %p439 = pneg %p137
        $region26: #{_lambda_.1} parent=11 // pred_check_branch
          %441 = sbr.rel (%p439) target = $region28
        $region27: #{_lambda_.1} parent=11 // pred_region
          _
        $region28: #{_lambda_.1} parent=11 // pred_fallthru
          _
        // Predicated region
        $region29: #{_lambda_.1} parent=11 // pred_check
          %p442 = pneg %p158
        $region30: #{_lambda_.1} parent=11 // pred_check_branch
          %444 = sbr.rel (%p442) target = $region32
        $region31: #{_lambda_.1} parent=11 // pred_region
          _
        $region32: #{_lambda_.1} parent=11 // pred_fallthru
          _
        // Predicated region
        $region33: #{_lambda_.1} parent=11 // pred_check
          %p445 = pneg %p179
        $region34: #{_lambda_.1} parent=11 // pred_check_branch
          %447 = sbr.rel (%p445) target = $region36
        $region35: #{_lambda_.1} parent=11 // pred_region
          _
        $region36: #{_lambda_.1} parent=11 // pred_fallthru
          _
        // Predicated region
        $region37: #{_lambda_.1} parent=11 // pred_check
          %p448 = pneg %p200
        $region38: #{_lambda_.1} parent=11 // pred_check_branch
          %450 = sbr.rel (%p448) target = $region40
        $region39: #{_lambda_.1} parent=11 // pred_region
          _
        $region40: #{_lambda_.1} parent=11 // pred_fallthru
          _
        // Predicated region
        $region41: #{_lambda_.1} parent=11 // pred_check
          %p451 = pneg %p221
        $region42: #{_lambda_.1} parent=11 // pred_check_branch
          %453 = sbr.rel (%p451) target = $region44
        $region43: #{_lambda_.1} parent=11 // pred_region
          _
        $region44: #{_lambda_.1} parent=11 // pred_fallthru
          _
        // Predicated region
        $region45: #{_lambda_.1} parent=11 // pred_check
          %p454 = pneg %p242
        $region46: #{_lambda_.1} parent=11 // pred_check_branch
          %456 = sbr.rel (%p454) target = $region48
        $region47: #{_lambda_.1} parent=11 // pred_region
          _
        $region48: #{_lambda_.1} parent=11 // pred_fallthru
          _
        // Predicated region
        $region49: #{_lambda_.1} parent=11 // pred_check
          %p457 = pneg %p263
        $region50: #{_lambda_.1} parent=11 // pred_check_branch
          %459 = sbr.rel (%p457) target = $region52
        $region51: #{_lambda_.1} parent=11 // pred_region
          _
        $region52: #{_lambda_.1} parent=11 // pred_fallthru
          _
        // Predicated region
        $region53: #{_lambda_.1} parent=11 // pred_check
          %p460 = pneg %p284
        $region54: #{_lambda_.1} parent=11 // pred_check_branch
          %462 = sbr.rel (%p460) target = $region56
        $region55: #{_lambda_.1} parent=11 // pred_region
          _
        $region56: #{_lambda_.1} parent=11 // pred_fallthru
          _
        // Predicated region
        $region57: #{_lambda_.1} parent=11 // pred_check
          %p463 = pneg %p305
        $region58: #{_lambda_.1} parent=11 // pred_check_branch
          %465 = sbr.rel (%p463) target = $region60
        $region59: #{_lambda_.1} parent=11 // pred_region
          _
        $region60: #{_lambda_.1} parent=11 // pred_fallthru
          _
        // Predicated region
        $region61: #{_lambda_.1} parent=11 // pred_check
          %p466 = pneg %p326
        $region62: #{_lambda_.1} parent=11 // pred_check_branch
          %468 = sbr.rel (%p466) target = $region64
        $region63: #{_lambda_.1} parent=11 // pred_region
          _
        $region64: #{_lambda_.1} parent=11 // pred_fallthru
          _
        // Predicated region
        $region65: #{_lambda_.1} parent=11 // pred_check
          %p469 = pneg %p347
        $region66: #{_lambda_.1} parent=11 // pred_check_branch
          %471 = sbr.rel (%p469) target = $region68
        $region67: #{_lambda_.1} parent=11 // pred_region
          _
        $region68: #{_lambda_.1} parent=11 // pred_fallthru
          _
        // Predicated region
        $region69: #{_lambda_.1} parent=11 // pred_check
          %p472 = pneg %p368
        $region70: #{_lambda_.1} parent=11 // pred_check_branch
          %474 = sbr.rel (%p472) target = $region72
        $region71: #{_lambda_.1} parent=11 // pred_region
          %s476 = ssub.s32 512, 512
          %477 = vsyncadd [#allocation3], %s476
          %s478 = sshll.u32 [#allocation2], 4
          %s479 = int_to_ptr.vmem [resolvable:$true] %s478
          %484 = dma.hbm_to_vmem [thread:$0]  %s15, 512, %s479, [#allocation3], 128, 128, 8
        $region72: #{_lambda_.1} parent=11 // pred_fallthru
          _
        // Predicated region
        $region73: #{_lambda_.1} parent=11 // pred_check
          %p485 = pneg %p389
        $region74: #{_lambda_.1} parent=11 // pred_check_branch
          %487 = sbr.rel (%p485) target = $region76
        $region75: #{_lambda_.1} parent=11 // pred_region
          _
        $region76: #{_lambda_.1} parent=11 // pred_fallthru
          _
      $region12: #{_lambda_.1} parent=5 // pred_fallthru
        _
      %p488 = scmp.lt.s32.totalorder %s27, 2
      // Predicated region
      $region77: #{_lambda_.1} parent=5 // pred_check
        %p489 = pneg %p488
      $region78: #{_lambda_.1} parent=5 // pred_check_branch
        %491 = sbr.rel (%p489) target = $region80
      $region79: #{_lambda_.1} parent=5 // pred_region
        // Predicated region
        $region81: #{_lambda_.1} parent=79 // pred_check
          %p492 = pneg %p47
        $region82: #{_lambda_.1} parent=79 // pred_check_branch
          %494 = sbr.rel (%p492) target = $region84
        $region83: #{_lambda_.1} parent=79 // pred_region
          %p495 = scmp.lt.s32.totalorder %s27, 1
          %s496 = scalar_select %p495, %s27, 1
          %s497 = smul.addr %s496, 8
          %s498 = scalar_lea.vmem %s0, %s497
        $region84: #{_lambda_.1} parent=79 // pred_fallthru
          _
      $region80: #{_lambda_.1} parent=5 // pred_fallthru
        _
      %p499 = scmp.le.s32.totalorder 1, %s27
      %p500 = scmp.lt.s32.totalorder %s27, 3
      %p501 = pnand %p499, %p500
      %p502 = pneg %p501
      // Predicated region
      $region85: #{_lambda_.1} parent=5 // pred_check
        _
      $region86: #{_lambda_.1} parent=5 // pred_check_branch
        %504 = sbr.rel (%p501) target = $region88
      $region87: #{_lambda_.1} parent=5 // pred_region
        %s505 = ssub.s32 %s27, 1
        // Predicated region
        $region89: #{_lambda_.1} parent=87 // pred_check
          %p506 = pneg %p368
        $region90: #{_lambda_.1} parent=87 // pred_check_branch
          %508 = sbr.rel (%p506) target = $region92
        $region91: #{_lambda_.1} parent=87 // pred_region
          %509 = dma.done [#allocation3], 512
        $region92: #{_lambda_.1} parent=87 // pred_fallthru
          _
        %p510 = scmp.lt.s32.totalorder %s32, 1
        %s511 = scalar_select %p510, %s32, 1
        %s512 = smul.addr %s511, 8
        %s513 = scalar_lea.vmem %s0, %s512
        %p514 = pneg %p53
        %p515 = pneg %p50
        %p516 = pneg %p74
        %p517 = pneg %p71
        %p518 = pneg %p95
        %p519 = pneg %p92
        %p520 = pneg %p116
        %p521 = pneg %p113
        %p522 = pneg %p137
        %p523 = pneg %p134
        %p524 = pneg %p158
        %p525 = pneg %p155
        %p526 = pneg %p179
        %p527 = pneg %p176
        %p528 = pneg %p200
        %p529 = pneg %p197
        %p530 = pneg %p221
        %p531 = pneg %p218
        %p532 = pneg %p242
        %p533 = pneg %p239
        %p534 = pneg %p263
        %p535 = pneg %p260
        %p536 = pneg %p284
        %p537 = pneg %p281
        %p538 = pneg %p305
        %p539 = pneg %p302
        %p540 = pneg %p326
        %p541 = pneg %p323
        %p542 = pneg %p347
        %p543 = pneg %p344
        %p544 = pneg %p368
        %p545 = pneg %p365
        %p546 = pneg %p389
        %p547 = pneg %p386
        %p548 = pneg %p415
        %p549 = pneg %p412
        %s550 = sand.u32 %s402, 1
        %s551 = scalar_lea.sflag [#allocation4], %s550
        %s552 = sand.u32 %s402, 1
        %s553 = smul.addr %s552, 8
        %s554 = scalar_lea.vmem [#allocation5], %s553
        %p555 = scmp.lt.s32.totalorder %s32, 1
        %s556 = scalar_select %p555, %s32, 1
        %s557 = smul.addr %s556, 8
        %s558 = scalar_lea.vmem %s0, %s557
        %v559 = vld [vmem:[%s558] sm:$0xff]
        %v560 = vlaneseq
        %v561 = vshrl.u32 %v560, 7
        %v562 = vlaneseq
        %v563 = vand.u32 %v562, 127
        %vm564 = vcmp.ge.s32.totalorder %v561, %v563
        %v565 = vld [vmem:[%s5] sm:$0x1]
        %v566 = vld [vmem:[%s6] sm:$0x1]
        %vm567 = vcmask 261120
        %v568 = vsel %vm567, %v559, 0.0
        %569 = vadd.xlane.f32.xlu0 %v568
        %v570 = vpop.xlane.xlu0 %569
        %v571 = vrcp.pop 32.0
        %v572 = vmul.f32 %v570, %v571
        %v573 = vsub.f32 %v559, %v572
        %v574 = vmul.f32 %v573, %v573
        %v575 = vsel %vm567, %v574, 0.0
        %576 = vadd.xlane.f32.xlu0 %v575
        %v577 = vpop.xlane.xlu0 %576
        %v578 = vmul.f32 %v577, %v571
        %v579 = vadd.f32 %v578, 1e-05
        %v580 = vrsqrt.pop %v579
        %v581 = vmul.f32 %v573, %v580
        %v583 = vlaneseq
        %v584 = vshrl.u32 %v583, 7
        %v585 = vsub.s32 0, %v584
        %v586 = vrot.slane %v565, %v585
        %v588 = vmul.f32 %v581, %v586
        %v590 = vlaneseq
        %v591 = vshrl.u32 %v590, 7
        %v592 = vsub.s32 0, %v591
        %v593 = vrot.slane %v566, %v592
        %v595 = vadd.f32 %v588, %v593
        %v596 = vld [vmem:[%s1] sm:$0xff]
        %v597 = vld [vmem:[%s1 + $0x8] sm:$0xff]
        %v598 = vld [vmem:[%s1 + $0x10] sm:$0xff]
        %v599 = vld [vmem:[%s1 + $0x18] sm:$0xff]
        %v600 = vld [vmem:[%s2] sm:$0x1]
        %v602 = vlaneseq
        %v603 = vshrl.u32 %v602, 7
        %v604 = vsub.s32 0, %v603
        %v605 = vrot.slane %v600, %v604
        %v608 = vsel %vm567, %v595, 0
        %610 = vmatprep.subr.mxu0 0.0
        %611 = vmatpush1.msra.mxu0 %v596
        %612 = vmatprep.subr.mxu0 0.0
        %613 = vmatpush1.msra.mxu0 %v597
        %614 = vmatprep.subr.mxu0 0.0
        %615 = vmatpush1.msra.mxu0 %v598
        %616 = vmatprep.subr.mxu0 0.0
        %617 = vmatpush1.msra.mxu0 %v599
        %618 = vmatprep.subr.mxu0 0.0
        %619 = vmatpush1.msra.mxu0 0.0
        %620 = vmatprep.subr.mxu0 0.0
        %621 = vmatpush1.msra.mxu0 0.0
        %622 = vmatprep.subr.mxu0 0.0
        %623 = vmatpush1.msra.mxu0 0.0
        %624 = vmatprep.subr.mxu0 0.0
        %625 = vmatpush1.msra.mxu0 0.0
        %626 = vmatprep.subr.mxu0 0.0
        %627 = vmatpush1.msra.mxu0 0.0
        %628 = vmatprep.subr.mxu0 0.0
        %629 = vmatpush1.msra.mxu0 0.0
        %630 = vmatprep.subr.mxu0 0.0
        %631 = vmatpush1.msra.mxu0 0.0
        %632 = vmatprep.subr.mxu0 0.0
        %633 = vmatpush1.msra.mxu0 0.0
        %634 = vmatprep.subr.mxu0 0.0
        %635 = vmatpush1.msra.mxu0 0.0
        %636 = vmatprep.subr.mxu0 0.0
        %637 = vmatpush1.msra.mxu0 0.0
        %638 = vmatprep.subr.mxu0 0.0
        %639 = vmatpush1.msra.mxu0 0.0
        %640 = vmatprep.subr.mxu0 0.0
        %641 = vmatpush1.msra.mxu0 0.0
        %642 = vmatprep.subr.mxu0 0.0
        %643 = vmatpush1.msra.mxu0 0.0
        %644 = vmatprep.subr.mxu0 0.0
        %645 = vmatpush1.msra.mxu0 0.0
        %646 = vmatprep.subr.mxu0 0.0
        %647 = vmatpush1.msra.mxu0 0.0
        %648 = vmatprep.subr.mxu0 0.0
        %649 = vmatpush1.msra.mxu0 0.0
        %650 = vmatprep.subr.mxu0 0.0
        %651 = vmatpush1.msra.mxu0 0.0
        %652 = vmatprep.subr.mxu0 0.0
        %653 = vmatpush1.msra.mxu0 0.0
        %654 = vmatprep.subr.mxu0 0.0
        %655 = vmatpush1.msra.mxu0 0.0
        %656 = vmatprep.subr.mxu0 0.0
        %657 = vmatpush1.msra.mxu0 0.0
        %658 = vmatprep.subr.mxu0 0.0
        %659 = vmatpush1.msra.mxu0 0.0
        %660 = vmatprep.subr.mxu0 0.0
        %661 = vmatpush1.msra.mxu0 0.0
        %662 = vmatprep.subr.mxu0 0.0
        %663 = vmatpush1.msra.mxu0 0.0
        %664 = vmatprep.subr.mxu0 0.0
        %665 = vmatpush1.msra.mxu0 0.0
        %666 = vmatprep.subr.mxu0 0.0
        %667 = vmatpush1.msra.mxu0 0.0
        %668 = vmatprep.subr.mxu0 0.0
        %669 = vmatpush1.msra.mxu0 0.0
        %670 = vmatprep.subr.mxu0 0.0
        %671 = vmatpush1.msra.mxu0 0.0
        %672 = vmatprep.subr.mxu0 0.0
        %673 = vmatpush1.msra.mxu0 0.0
        %674 = vmatprep.mubr.f32.mxu0 0.0
        %675 = vmatmul.mubr.f32.gmra.mrb[0].mxu0 %v608
        %v676 = vpop.f32.mrb[0].mxu0
        %v677 = vadd.f32 %v605, %v676
        %v678 = vpop.f32.mrb[0].mxu0
        %679 = vdwg.mxu0
        %681 = vrot.lane.b32.xlu0 %v677, 96
        %v682 = vpop.permute.xlu0 %681
        %vm683 = vcmask 130048
        %v684 = vsel %vm683, %v677, 0
        %v686 = vsel %vm683, %v682, 0
        %688 = vmatprep.subr.mxu0 0.0
        %689 = vmatpush1.xpose.msra.mxu0 %v686
        %690 = vmatprep.subr.mxu0 0.0
        %691 = vmatpush1.xpose.msra.mxu0 0.0
        %692 = vmatprep.subr.mxu0 0.0
        %693 = vmatpush1.xpose.msra.mxu0 0.0
        %694 = vmatprep.subr.mxu0 0.0
        %695 = vmatpush1.xpose.msra.mxu0 0.0
        %696 = vmatprep.subr.mxu0 0.0
        %697 = vmatpush1.xpose.msra.mxu0 0.0
        %698 = vmatprep.subr.mxu0 0.0
        %699 = vmatpush1.xpose.msra.mxu0 0.0
        %700 = vmatprep.subr.mxu0 0.0
        %701 = vmatpush1.xpose.msra.mxu0 0.0
        %702 = vmatprep.subr.mxu0 0.0
        %703 = vmatpush1.xpose.msra.mxu0 0.0
        %704 = vmatprep.subr.mxu0 0.0
        %705 = vmatpush1.xpose.msra.mxu0 0.0
        %706 = vmatprep.subr.mxu0 0.0
        %707 = vmatpush1.xpose.msra.mxu0 0.0
        %708 = vmatprep.subr.mxu0 0.0
        %709 = vmatpush1.xpose.msra.mxu0 0.0
        %710 = vmatprep.subr.mxu0 0.0
        %711 = vmatpush1.xpose.msra.mxu0 0.0
        %712 = vmatprep.subr.mxu0 0.0
        %713 = vmatpush1.xpose.msra.mxu0 0.0
        %714 = vmatprep.subr.mxu0 0.0
        %715 = vmatpush1.xpose.msra.mxu0 0.0
        %716 = vmatprep.subr.mxu0 0.0
        %717 = vmatpush1.xpose.msra.mxu0 0.0
        %718 = vmatprep.subr.mxu0 0.0
        %719 = vmatpush1.xpose.msra.mxu0 0.0
        %720 = vmatprep.subr.mxu0 0.0
        %721 = vmatpush1.xpose.msra.mxu0 0.0
        %722 = vmatprep.subr.mxu0 0.0
        %723 = vmatpush1.xpose.msra.mxu0 0.0
        %724 = vmatprep.subr.mxu0 0.0
        %725 = vmatpush1.xpose.msra.mxu0 0.0
        %726 = vmatprep.subr.mxu0 0.0
        %727 = vmatpush1.xpose.msra.mxu0 0.0
        %728 = vmatprep.subr.mxu0 0.0
        %729 = vmatpush1.xpose.msra.mxu0 0.0
        %730 = vmatprep.subr.mxu0 0.0
        %731 = vmatpush1.xpose.msra.mxu0 0.0
        %732 = vmatprep.subr.mxu0 0.0
        %733 = vmatpush1.xpose.msra.mxu0 0.0
        %734 = vmatprep.subr.mxu0 0.0
        %735 = vmatpush1.xpose.msra.mxu0 0.0
        %736 = vmatprep.subr.mxu0 0.0
        %737 = vmatpush1.xpose.msra.mxu0 0.0
        %738 = vmatprep.subr.mxu0 0.0
        %739 = vmatpush1.xpose.msra.mxu0 0.0
        %740 = vmatprep.subr.mxu0 0.0
        %741 = vmatpush1.xpose.msra.mxu0 0.0
        %742 = vmatprep.subr.mxu0 0.0
        %743 = vmatpush1.xpose.msra.mxu0 0.0
        %744 = vmatprep.subr.mxu0 0.0
        %745 = vmatpush1.xpose.msra.mxu0 0.0
        %746 = vmatprep.subr.mxu0 0.0
        %747 = vmatpush1.xpose.msra.mxu0 0.0
        %748 = vmatprep.subr.mxu0 0.0
        %749 = vmatpush1.xpose.msra.mxu0 0.0
        %750 = vmatprep.subr.mxu0 0.0
        %751 = vmatpush1.xpose.msra.mxu0 0.0
        %752 = vmatprep.mubr.f32.mxu0 0.0
        %753 = vmatmul.mubr.f32.gmra.mrb[0].mxu0 %v684
        %v754 = vpop.f32.mrb[0].mxu0
        %v755 = vadd.f32 0.0, %v754
        %v756 = vpop.f32.mrb[0].mxu0
        %757 = vdwg.mxu0
        %v758 = vsel %vm564, %v755, 0.0
        %vm759 = vcmp.eq.f32.partialorder %v758, 0.0
        %v760 = vsel %vm759, -inf, %v758
        %vm761 = vcmask 64512
        %v762 = vsel %vm761, %v760, -inf
        %763 = vmax.xlane.f32.xlu0 %v762
        %v764 = vpop.xlane.xlu0 %763
        %v765 = vsub.f32 %v760, %v764
        %v766 = vmul.f32 %v765, 1.442695
        %v767 = vpow.pop %v766
        %v768 = vsel %vm761, %v767, 0.0
        %769 = vadd.xlane.f32.xlu0 %v768
        %v770 = vpop.xlane.xlu0 %769
        %v771 = vrcp.pop %v770
        %v772 = vmul.f32 %v767, %v771
        %773 = vrot.lane.b32.xlu0 %v677, 64
        %v774 = vpop.permute.xlu0 %773
        %v777 = vsel %vm761, %v772, 0
        %779 = vmatprep.subr.mxu0 0.0
        %780 = vmatpush1.msra.mxu0 %v774
        %781 = vmatprep.subr.mxu0 0.0
        %782 = vmatpush1.msra.mxu0 0.0
        %783 = vmatprep.subr.mxu0 0.0
        %784 = vmatpush1.msra.mxu0 0.0
        %785 = vmatprep.subr.mxu0 0.0
        %786 = vmatpush1.msra.mxu0 0.0
        %787 = vmatprep.subr.mxu0 0.0
        %788 = vmatpush1.msra.mxu0 0.0
        %789 = vmatprep.subr.mxu0 0.0
        %790 = vmatpush1.msra.mxu0 0.0
        %791 = vmatprep.subr.mxu0 0.0
        %792 = vmatpush1.msra.mxu0 0.0
        %793 = vmatprep.subr.mxu0 0.0
        %794 = vmatpush1.msra.mxu0 0.0
        %795 = vmatprep.subr.mxu0 0.0
        %796 = vmatpush1.msra.mxu0 0.0
        %797 = vmatprep.subr.mxu0 0.0
        %798 = vmatpush1.msra.mxu0 0.0
        %799 = vmatprep.subr.mxu0 0.0
        %800 = vmatpush1.msra.mxu0 0.0
        %801 = vmatprep.subr.mxu0 0.0
        %802 = vmatpush1.msra.mxu0 0.0
        %803 = vmatprep.subr.mxu0 0.0
        %804 = vmatpush1.msra.mxu0 0.0
        %805 = vmatprep.subr.mxu0 0.0
        %806 = vmatpush1.msra.mxu0 0.0
        %807 = vmatprep.subr.mxu0 0.0
        %808 = vmatpush1.msra.mxu0 0.0
        %809 = vmatprep.subr.mxu0 0.0
        %810 = vmatpush1.msra.mxu0 0.0
        %811 = vmatprep.subr.mxu0 0.0
        %812 = vmatpush1.msra.mxu0 0.0
        %813 = vmatprep.subr.mxu0 0.0
        %814 = vmatpush1.msra.mxu0 0.0
        %815 = vmatprep.subr.mxu0 0.0
        %816 = vmatpush1.msra.mxu0 0.0
        %817 = vmatprep.subr.mxu0 0.0
        %818 = vmatpush1.msra.mxu0 0.0
        %819 = vmatprep.subr.mxu0 0.0
        %820 = vmatpush1.msra.mxu0 0.0
        %821 = vmatprep.subr.mxu0 0.0
        %822 = vmatpush1.msra.mxu0 0.0
        %823 = vmatprep.subr.mxu0 0.0
        %824 = vmatpush1.msra.mxu0 0.0
        %825 = vmatprep.subr.mxu0 0.0
        %826 = vmatpush1.msra.mxu0 0.0
        %827 = vmatprep.subr.mxu0 0.0
        %828 = vmatpush1.msra.mxu0 0.0
        %829 = vmatprep.subr.mxu0 0.0
        %830 = vmatpush1.msra.mxu0 0.0
        %831 = vmatprep.subr.mxu0 0.0
        %832 = vmatpush1.msra.mxu0 0.0
        %833 = vmatprep.subr.mxu0 0.0
        %834 = vmatpush1.msra.mxu0 0.0
        %835 = vmatprep.subr.mxu0 0.0
        %836 = vmatpush1.msra.mxu0 0.0
        %837 = vmatprep.subr.mxu0 0.0
        %838 = vmatpush1.msra.mxu0 0.0
        %839 = vmatprep.subr.mxu0 0.0
        %840 = vmatpush1.msra.mxu0 0.0
        %841 = vmatprep.subr.mxu0 0.0
        %842 = vmatpush1.msra.mxu0 0.0
        %843 = vmatprep.mubr.f32.mxu0 0.0
        %844 = vmatmul.mubr.f32.gmra.mrb[0].mxu0 %v777
        %v845 = vpop.f32.mrb[0].mxu0
        %v846 = vadd.f32 0.0, %v845
        %v847 = vpop.f32.mrb[0].mxu0
        %848 = vdwg.mxu0
        %849 = vrot.lane.b32.xlu0 %v677, 112
        %v850 = vpop.permute.xlu0 %849
        %851 = vrot.lane.b32.xlu0 %v677, 80
        %v852 = vpop.permute.xlu0 %851
        %v853 = vsel %vm683, %v850, 0
        %v855 = vsel %vm683, %v852, 0
        %857 = vmatprep.subr.mxu0 0.0
        %858 = vmatpush1.xpose.msra.mxu0 %v855
        %859 = vmatprep.subr.mxu0 0.0
        %860 = vmatpush1.xpose.msra.mxu0 0.0
        %861 = vmatprep.subr.mxu0 0.0
        %862 = vmatpush1.xpose.msra.mxu0 0.0
        %863 = vmatprep.subr.mxu0 0.0
        %864 = vmatpush1.xpose.msra.mxu0 0.0
        %865 = vmatprep.subr.mxu0 0.0
        %866 = vmatpush1.xpose.msra.mxu0 0.0
        %867 = vmatprep.subr.mxu0 0.0
        %868 = vmatpush1.xpose.msra.mxu0 0.0
        %869 = vmatprep.subr.mxu0 0.0
        %870 = vmatpush1.xpose.msra.mxu0 0.0
        %871 = vmatprep.subr.mxu0 0.0
        %872 = vmatpush1.xpose.msra.mxu0 0.0
        %873 = vmatprep.subr.mxu0 0.0
        %874 = vmatpush1.xpose.msra.mxu0 0.0
        %875 = vmatprep.subr.mxu0 0.0
        %876 = vmatpush1.xpose.msra.mxu0 0.0
        %877 = vmatprep.subr.mxu0 0.0
        %878 = vmatpush1.xpose.msra.mxu0 0.0
        %879 = vmatprep.subr.mxu0 0.0
        %880 = vmatpush1.xpose.msra.mxu0 0.0
        %881 = vmatprep.subr.mxu0 0.0
        %882 = vmatpush1.xpose.msra.mxu0 0.0
        %883 = vmatprep.subr.mxu0 0.0
        %884 = vmatpush1.xpose.msra.mxu0 0.0
        %885 = vmatprep.subr.mxu0 0.0
        %886 = vmatpush1.xpose.msra.mxu0 0.0
        %887 = vmatprep.subr.mxu0 0.0
        %888 = vmatpush1.xpose.msra.mxu0 0.0
        %889 = vmatprep.subr.mxu0 0.0
        %890 = vmatpush1.xpose.msra.mxu0 0.0
        %891 = vmatprep.subr.mxu0 0.0
        %892 = vmatpush1.xpose.msra.mxu0 0.0
        %893 = vmatprep.subr.mxu0 0.0
        %894 = vmatpush1.xpose.msra.mxu0 0.0
        %895 = vmatprep.subr.mxu0 0.0
        %896 = vmatpush1.xpose.msra.mxu0 0.0
        %897 = vmatprep.subr.mxu0 0.0
        %898 = vmatpush1.xpose.msra.mxu0 0.0
        %899 = vmatprep.subr.mxu0 0.0
        %900 = vmatpush1.xpose.msra.mxu0 0.0
        %901 = vmatprep.subr.mxu0 0.0
        %902 = vmatpush1.xpose.msra.mxu0 0.0
        %903 = vmatprep.subr.mxu0 0.0
        %904 = vmatpush1.xpose.msra.mxu0 0.0
        %905 = vmatprep.subr.mxu0 0.0
        %906 = vmatpush1.xpose.msra.mxu0 0.0
        %907 = vmatprep.subr.mxu0 0.0
        %908 = vmatpush1.xpose.msra.mxu0 0.0
        %909 = vmatprep.subr.mxu0 0.0
        %910 = vmatpush1.xpose.msra.mxu0 0.0
        %911 = vmatprep.subr.mxu0 0.0
        %912 = vmatpush1.xpose.msra.mxu0 0.0
        %913 = vmatprep.subr.mxu0 0.0
        %914 = vmatpush1.xpose.msra.mxu0 0.0
        %915 = vmatprep.subr.mxu0 0.0
        %916 = vmatpush1.xpose.msra.mxu0 0.0
        %917 = vmatprep.subr.mxu0 0.0
        %918 = vmatpush1.xpose.msra.mxu0 0.0
        %919 = vmatprep.subr.mxu0 0.0
        %920 = vmatpush1.xpose.msra.mxu0 0.0
        %921 = vmatprep.mubr.f32.mxu0 0.0
        %922 = vmatmul.mubr.f32.gmra.mrb[0].mxu0 %v853
        %v923 = vpop.f32.mrb[0].mxu0
        %v924 = vadd.f32 0.0, %v923
        %v925 = vpop.f32.mrb[0].mxu0
        %926 = vdwg.mxu0
        %v927 = vsel %vm564, %v924, 0.0
        %vm928 = vcmp.eq.f32.partialorder %v927, 0.0
        %v929 = vsel %vm928, -inf, %v927
        %v930 = vsel %vm761, %v929, -inf
        %931 = vmax.xlane.f32.xlu0 %v930
        %v932 = vpop.xlane.xlu0 %931
        %v933 = vsub.f32 %v929, %v932
        %v934 = vmul.f32 %v933, 1.442695
        %v935 = vpow.pop %v934
        %v936 = vsel %vm761, %v935, 0.0
        %937 = vadd.xlane.f32.xlu0 %v936
        %v938 = vpop.xlane.xlu0 %937
        %v939 = vrcp.pop %v938
        %v940 = vmul.f32 %v935, %v939
        %941 = vrot.lane.b32.xlu0 %v677, 48
        %v942 = vpop.permute.xlu0 %941
        %v945 = vsel %vm761, %v940, 0
        %947 = vmatprep.subr.mxu0 0.0
        %948 = vmatpush1.msra.mxu0 %v942
        %949 = vmatprep.subr.mxu0 0.0
        %950 = vmatpush1.msra.mxu0 0.0
        %951 = vmatprep.subr.mxu0 0.0
        %952 = vmatpush1.msra.mxu0 0.0
        %953 = vmatprep.subr.mxu0 0.0
        %954 = vmatpush1.msra.mxu0 0.0
        %955 = vmatprep.subr.mxu0 0.0
        %956 = vmatpush1.msra.mxu0 0.0
        %957 = vmatprep.subr.mxu0 0.0
        %958 = vmatpush1.msra.mxu0 0.0
        %959 = vmatprep.subr.mxu0 0.0
        %960 = vmatpush1.msra.mxu0 0.0
        %961 = vmatprep.subr.mxu0 0.0
        %962 = vmatpush1.msra.mxu0 0.0
        %963 = vmatprep.subr.mxu0 0.0
        %964 = vmatpush1.msra.mxu0 0.0
        %965 = vmatprep.subr.mxu0 0.0
        %966 = vmatpush1.msra.mxu0 0.0
        %967 = vmatprep.subr.mxu0 0.0
        %968 = vmatpush1.msra.mxu0 0.0
        %969 = vmatprep.subr.mxu0 0.0
        %970 = vmatpush1.msra.mxu0 0.0
        %971 = vmatprep.subr.mxu0 0.0
        %972 = vmatpush1.msra.mxu0 0.0
        %973 = vmatprep.subr.mxu0 0.0
        %974 = vmatpush1.msra.mxu0 0.0
        %975 = vmatprep.subr.mxu0 0.0
        %976 = vmatpush1.msra.mxu0 0.0
        %977 = vmatprep.subr.mxu0 0.0
        %978 = vmatpush1.msra.mxu0 0.0
        %979 = vmatprep.subr.mxu0 0.0
        %980 = vmatpush1.msra.mxu0 0.0
        %981 = vmatprep.subr.mxu0 0.0
        %982 = vmatpush1.msra.mxu0 0.0
        %983 = vmatprep.subr.mxu0 0.0
        %984 = vmatpush1.msra.mxu0 0.0
        %985 = vmatprep.subr.mxu0 0.0
        %986 = vmatpush1.msra.mxu0 0.0
        %987 = vmatprep.subr.mxu0 0.0
        %988 = vmatpush1.msra.mxu0 0.0
        %989 = vmatprep.subr.mxu0 0.0
        %990 = vmatpush1.msra.mxu0 0.0
        %991 = vmatprep.subr.mxu0 0.0
        %992 = vmatpush1.msra.mxu0 0.0
        %993 = vmatprep.subr.mxu0 0.0
        %994 = vmatpush1.msra.mxu0 0.0
        %995 = vmatprep.subr.mxu0 0.0
        %996 = vmatpush1.msra.mxu0 0.0
        %997 = vmatprep.subr.mxu0 0.0
        %998 = vmatpush1.msra.mxu0 0.0
        %999 = vmatprep.subr.mxu0 0.0
        %1000 = vmatpush1.msra.mxu0 0.0
        %1001 = vmatprep.subr.mxu0 0.0
        %1002 = vmatpush1.msra.mxu0 0.0
        %1003 = vmatprep.subr.mxu0 0.0
        %1004 = vmatpush1.msra.mxu0 0.0
        %1005 = vmatprep.subr.mxu0 0.0
        %1006 = vmatpush1.msra.mxu0 0.0
        %1007 = vmatprep.subr.mxu0 0.0
        %1008 = vmatpush1.msra.mxu0 0.0
        %1009 = vmatprep.subr.mxu0 0.0
        %1010 = vmatpush1.msra.mxu0 0.0
        %1011 = vmatprep.mubr.f32.mxu0 0.0
        %1012 = vmatmul.mubr.f32.gmra.mrb[0].mxu0 %v945
        %v1013 = vpop.f32.mrb[0].mxu0
        %v1014 = vadd.f32 0.0, %v1013
        %v1015 = vpop.f32.mrb[0].mxu0
        %1016 = vdwg.mxu0
        %1018 = vrot.lane.b32.xlu0 %v1014, 16
        %v1019 = vpop.permute.xlu0 %1018
        %v1021 = vsel %vm683, %v846, %v1019
        %v1022 = vld [vmem:[%s3] sm:$0xff]
        %v1023 = vld [vmem:[%s3 + $0x8] sm:$0xff]
        %v1024 = vld [vmem:[%s3 + $0x10] sm:$0xff]
        %v1025 = vld [vmem:[%s3 + $0x18] sm:$0xff]
        %v1026 = vld [vmem:[%s4] sm:$0x1]
        %v1028 = vlaneseq
        %v1029 = vshrl.u32 %v1028, 7
        %v1030 = vsub.s32 0, %v1029
        %v1031 = vrot.slane %v1026, %v1030
        %v1034 = vsel %vm567, %v1021, 0
        %1036 = vmatprep.subr.mxu0 0.0
        %1037 = vmatpush1.msra.mxu0 %v1022
        %1038 = vmatprep.subr.mxu0 0.0
        %1039 = vmatpush1.msra.mxu0 %v1023
        %1040 = vmatprep.subr.mxu0 0.0
        %1041 = vmatpush1.msra.mxu0 %v1024
        %1042 = vmatprep.subr.mxu0 0.0
        %1043 = vmatpush1.msra.mxu0 %v1025
        %1044 = vmatprep.subr.mxu0 0.0
        %1045 = vmatpush1.msra.mxu0 0.0
        %1046 = vmatprep.subr.mxu0 0.0
        %1047 = vmatpush1.msra.mxu0 0.0
        %1048 = vmatprep.subr.mxu0 0.0
        %1049 = vmatpush1.msra.mxu0 0.0
        %1050 = vmatprep.subr.mxu0 0.0
        %1051 = vmatpush1.msra.mxu0 0.0
        %1052 = vmatprep.subr.mxu0 0.0
        %1053 = vmatpush1.msra.mxu0 0.0
        %1054 = vmatprep.subr.mxu0 0.0
        %1055 = vmatpush1.msra.mxu0 0.0
        %1056 = vmatprep.subr.mxu0 0.0
        %1057 = vmatpush1.msra.mxu0 0.0
        %1058 = vmatprep.subr.mxu0 0.0
        %1059 = vmatpush1.msra.mxu0 0.0
        %1060 = vmatprep.subr.mxu0 0.0
        %1061 = vmatpush1.msra.mxu0 0.0
        %1062 = vmatprep.subr.mxu0 0.0
        %1063 = vmatpush1.msra.mxu0 0.0
        %1064 = vmatprep.subr.mxu0 0.0
        %1065 = vmatpush1.msra.mxu0 0.0
        %1066 = vmatprep.subr.mxu0 0.0
        %1067 = vmatpush1.msra.mxu0 0.0
        %1068 = vmatprep.subr.mxu0 0.0
        %1069 = vmatpush1.msra.mxu0 0.0
        %1070 = vmatprep.subr.mxu0 0.0
        %1071 = vmatpush1.msra.mxu0 0.0
        %1072 = vmatprep.subr.mxu0 0.0
        %1073 = vmatpush1.msra.mxu0 0.0
        %1074 = vmatprep.subr.mxu0 0.0
        %1075 = vmatpush1.msra.mxu0 0.0
        %1076 = vmatprep.subr.mxu0 0.0
        %1077 = vmatpush1.msra.mxu0 0.0
        %1078 = vmatprep.subr.mxu0 0.0
        %1079 = vmatpush1.msra.mxu0 0.0
        %1080 = vmatprep.subr.mxu0 0.0
        %1081 = vmatpush1.msra.mxu0 0.0
        %1082 = vmatprep.subr.mxu0 0.0
        %1083 = vmatpush1.msra.mxu0 0.0
        %1084 = vmatprep.subr.mxu0 0.0
        %1085 = vmatpush1.msra.mxu0 0.0
        %1086 = vmatprep.subr.mxu0 0.0
        %1087 = vmatpush1.msra.mxu0 0.0
        %1088 = vmatprep.subr.mxu0 0.0
        %1089 = vmatpush1.msra.mxu0 0.0
        %1090 = vmatprep.subr.mxu0 0.0
        %1091 = vmatpush1.msra.mxu0 0.0
        %1092 = vmatprep.subr.mxu0 0.0
        %1093 = vmatpush1.msra.mxu0 0.0
        %1094 = vmatprep.subr.mxu0 0.0
        %1095 = vmatpush1.msra.mxu0 0.0
        %1096 = vmatprep.subr.mxu0 0.0
        %1097 = vmatpush1.msra.mxu0 0.0
        %1098 = vmatprep.subr.mxu0 0.0
        %1099 = vmatpush1.msra.mxu0 0.0
        %1100 = vmatprep.mubr.f32.mxu0 0.0
        %1101 = vmatmul.mubr.f32.gmra.mrb[0].mxu0 %v1034
        %v1102 = vpop.f32.mrb[0].mxu0
        %v1103 = vadd.f32 %v1031, %v1102
        %v1104 = vpop.f32.mrb[0].mxu0
        %1105 = vdwg.mxu0
        %v1106 = vadd.f32 %v559, %v1103
        %v1107 = vld [vmem:[%s7] sm:$0x1]
        %v1108 = vld [vmem:[%s8] sm:$0x1]
        %v1109 = vsel %vm567, %v1106, 0.0
        %1110 = vadd.xlane.f32.xlu0 %v1109
        %v1111 = vpop.xlane.xlu0 %1110
        %v1112 = vmul.f32 %v1111, %v571
        %v1113 = vsub.f32 %v1106, %v1112
        %v1114 = vmul.f32 %v1113, %v1113
        %v1115 = vsel %vm567, %v1114, 0.0
        %1116 = vadd.xlane.f32.xlu0 %v1115
        %v1117 = vpop.xlane.xlu0 %1116
        %v1118 = vmul.f32 %v1117, %v571
        %v1119 = vadd.f32 %v1118, 1e-05
        %v1120 = vrsqrt.pop %v1119
        %v1121 = vmul.f32 %v1113, %v1120
        %v1123 = vlaneseq
        %v1124 = vshrl.u32 %v1123, 7
        %v1125 = vsub.s32 0, %v1124
        %v1126 = vrot.slane %v1107, %v1125
        %v1128 = vmul.f32 %v1121, %v1126
        %v1130 = vlaneseq
        %v1131 = vshrl.u32 %v1130, 7
        %v1132 = vsub.s32 0, %v1131
        %v1133 = vrot.slane %v1108, %v1132
        %v1135 = vadd.f32 %v1128, %v1133
        %v1136 = vld [vmem:[%s9] sm:$0xff]
        %v1137 = vld [vmem:[%s9 + $0x8] sm:$0xff]
        %v1138 = vld [vmem:[%s9 + $0x10] sm:$0xff]
        %v1139 = vld [vmem:[%s9 + $0x18] sm:$0xff]
        %v1140 = vld [vmem:[%s10] sm:$0x1]
        %v1142 = vlaneseq
        %v1143 = vshrl.u32 %v1142, 7
        %v1144 = vsub.s32 0, %v1143
        %v1145 = vrot.slane %v1140, %v1144
        %v1148 = vsel %vm567, %v1135, 0
        %1150 = vmatprep.subr.mxu0 0.0
        %1151 = vmatpush1.msra.mxu0 %v1136
        %1152 = vmatprep.subr.mxu0 0.0
        %1153 = vmatpush1.msra.mxu0 %v1137
        %1154 = vmatprep.subr.mxu0 0.0
        %1155 = vmatpush1.msra.mxu0 %v1138
        %1156 = vmatprep.subr.mxu0 0.0
        %1157 = vmatpush1.msra.mxu0 %v1139
        %1158 = vmatprep.subr.mxu0 0.0
        %1159 = vmatpush1.msra.mxu0 0.0
        %1160 = vmatprep.subr.mxu0 0.0
        %1161 = vmatpush1.msra.mxu0 0.0
        %1162 = vmatprep.subr.mxu0 0.0
        %1163 = vmatpush1.msra.mxu0 0.0
        %1164 = vmatprep.subr.mxu0 0.0
        %1165 = vmatpush1.msra.mxu0 0.0
        %1166 = vmatprep.subr.mxu0 0.0
        %1167 = vmatpush1.msra.mxu0 0.0
        %1168 = vmatprep.subr.mxu0 0.0
        %1169 = vmatpush1.msra.mxu0 0.0
        %1170 = vmatprep.subr.mxu0 0.0
        %1171 = vmatpush1.msra.mxu0 0.0
        %1172 = vmatprep.subr.mxu0 0.0
        %1173 = vmatpush1.msra.mxu0 0.0
        %1174 = vmatprep.subr.mxu0 0.0
        %1175 = vmatpush1.msra.mxu0 0.0
        %1176 = vmatprep.subr.mxu0 0.0
        %1177 = vmatpush1.msra.mxu0 0.0
        %1178 = vmatprep.subr.mxu0 0.0
        %1179 = vmatpush1.msra.mxu0 0.0
        %1180 = vmatprep.subr.mxu0 0.0
        %1181 = vmatpush1.msra.mxu0 0.0
        %1182 = vmatprep.subr.mxu0 0.0
        %1183 = vmatpush1.msra.mxu0 0.0
        %1184 = vmatprep.subr.mxu0 0.0
        %1185 = vmatpush1.msra.mxu0 0.0
        %1186 = vmatprep.subr.mxu0 0.0
        %1187 = vmatpush1.msra.mxu0 0.0
        %1188 = vmatprep.subr.mxu0 0.0
        %1189 = vmatpush1.msra.mxu0 0.0
        %1190 = vmatprep.subr.mxu0 0.0
        %1191 = vmatpush1.msra.mxu0 0.0
        %1192 = vmatprep.subr.mxu0 0.0
        %1193 = vmatpush1.msra.mxu0 0.0
        %1194 = vmatprep.subr.mxu0 0.0
        %1195 = vmatpush1.msra.mxu0 0.0
        %1196 = vmatprep.subr.mxu0 0.0
        %1197 = vmatpush1.msra.mxu0 0.0
        %1198 = vmatprep.subr.mxu0 0.0
        %1199 = vmatpush1.msra.mxu0 0.0
        %1200 = vmatprep.subr.mxu0 0.0
        %1201 = vmatpush1.msra.mxu0 0.0
        %1202 = vmatprep.subr.mxu0 0.0
        %1203 = vmatpush1.msra.mxu0 0.0
        %1204 = vmatprep.subr.mxu0 0.0
        %1205 = vmatpush1.msra.mxu0 0.0
        %1206 = vmatprep.subr.mxu0 0.0
        %1207 = vmatpush1.msra.mxu0 0.0
        %1208 = vmatprep.subr.mxu0 0.0
        %1209 = vmatpush1.msra.mxu0 0.0
        %1210 = vmatprep.subr.mxu0 0.0
        %1211 = vmatpush1.msra.mxu0 0.0
        %1212 = vmatprep.subr.mxu0 0.0
        %1213 = vmatpush1.msra.mxu0 0.0
        %1214 = vmatprep.mubr.f32.mxu0 0.0
        %1215 = vmatmul.mubr.f32.gmra.mrb[0].mxu0 %v1148
        %v1216 = vpop.f32.mrb[0].mxu0
        %v1217 = vadd.f32 %v1145, %v1216
        %v1218 = vpop.f32.mrb[0].mxu0
        %1219 = vdwg.mxu0
        %v1220 = vmax.f32 %v1217, 0.0
        %v1221 = vld [vmem:[%s11] sm:$0xff]
        %v1222 = vld [vmem:[%s11 + $0x8] sm:$0xff]
        %v1223 = vld [vmem:[%s11 + $0x10] sm:$0xff]
        %v1224 = vld [vmem:[%s11 + $0x18] sm:$0xff]
        %v1225 = vld [vmem:[%s11 + $0x20] sm:$0xff]
        %v1226 = vld [vmem:[%s11 + $0x28] sm:$0xff]
        %v1227 = vld [vmem:[%s11 + $0x30] sm:$0xff]
        %v1228 = vld [vmem:[%s11 + $0x38] sm:$0xff]
        %v1229 = vld [vmem:[%s11 + $0x40] sm:$0xff]
        %v1230 = vld [vmem:[%s11 + $0x48] sm:$0xff]
        %v1231 = vld [vmem:[%s11 + $0x50] sm:$0xff]
        %v1232 = vld [vmem:[%s11 + $0x58] sm:$0xff]
        %v1233 = vld [vmem:[%s11 + $0x60] sm:$0xff]
        %v1234 = vld [vmem:[%s11 + $0x68] sm:$0xff]
        %v1235 = vld [vmem:[%s11 + $0x70] sm:$0xff]
        %v1236 = vld [vmem:[%s11 + $0x78] sm:$0xff]
        %v1237 = vld [vmem:[%s12] sm:$0x1]
        %v1239 = vlaneseq
        %v1240 = vshrl.u32 %v1239, 7
        %v1241 = vsub.s32 0, %v1240
        %v1242 = vrot.slane %v1237, %v1241
        %1244 = vmatprep.subr.mxu0 0.0
        %1245 = vmatpush1.msra.mxu0 %v1221
        %1246 = vmatprep.subr.mxu0 0.0
        %1247 = vmatpush1.msra.mxu0 %v1222
        %1248 = vmatprep.subr.mxu0 0.0
        %1249 = vmatpush1.msra.mxu0 %v1223
        %1250 = vmatprep.subr.mxu0 0.0
        %1251 = vmatpush1.msra.mxu0 %v1224
        %1252 = vmatprep.subr.mxu0 0.0
        %1253 = vmatpush1.msra.mxu0 %v1225
        %1254 = vmatprep.subr.mxu0 0.0
        %1255 = vmatpush1.msra.mxu0 %v1226
        %1256 = vmatprep.subr.mxu0 0.0
        %1257 = vmatpush1.msra.mxu0 %v1227
        %1258 = vmatprep.subr.mxu0 0.0
        %1259 = vmatpush1.msra.mxu0 %v1228
        %1260 = vmatprep.subr.mxu0 0.0
        %1261 = vmatpush1.msra.mxu0 %v1229
        %1262 = vmatprep.subr.mxu0 0.0
        %1263 = vmatpush1.msra.mxu0 %v1230
        %1264 = vmatprep.subr.mxu0 0.0
        %1265 = vmatpush1.msra.mxu0 %v1231
        %1266 = vmatprep.subr.mxu0 0.0
        %1267 = vmatpush1.msra.mxu0 %v1232
        %1268 = vmatprep.subr.mxu0 0.0
        %1269 = vmatpush1.msra.mxu0 %v1233
        %1270 = vmatprep.subr.mxu0 0.0
        %1271 = vmatpush1.msra.mxu0 %v1234
        %1272 = vmatprep.subr.mxu0 0.0
        %1273 = vmatpush1.msra.mxu0 %v1235
        %1274 = vmatprep.subr.mxu0 0.0
        %1275 = vmatpush1.msra.mxu0 %v1236
        %1276 = vmatprep.subr.mxu0 0.0
        %1277 = vmatpush1.msra.mxu0 0.0
        %1278 = vmatprep.subr.mxu0 0.0
        %1279 = vmatpush1.msra.mxu0 0.0
        %1280 = vmatprep.subr.mxu0 0.0
        %1281 = vmatpush1.msra.mxu0 0.0
        %1282 = vmatprep.subr.mxu0 0.0
        %1283 = vmatpush1.msra.mxu0 0.0
        %1284 = vmatprep.subr.mxu0 0.0
        %1285 = vmatpush1.msra.mxu0 0.0
        %1286 = vmatprep.subr.mxu0 0.0
        %1287 = vmatpush1.msra.mxu0 0.0
        %1288 = vmatprep.subr.mxu0 0.0
        %1289 = vmatpush1.msra.mxu0 0.0
        %1290 = vmatprep.subr.mxu0 0.0
        %1291 = vmatpush1.msra.mxu0 0.0
        %1292 = vmatprep.subr.mxu0 0.0
        %1293 = vmatpush1.msra.mxu0 0.0
        %1294 = vmatprep.subr.mxu0 0.0
        %1295 = vmatpush1.msra.mxu0 0.0
        %1296 = vmatprep.subr.mxu0 0.0
        %1297 = vmatpush1.msra.mxu0 0.0
        %1298 = vmatprep.subr.mxu0 0.0
        %1299 = vmatpush1.msra.mxu0 0.0
        %1300 = vmatprep.subr.mxu0 0.0
        %1301 = vmatpush1.msra.mxu0 0.0
        %1302 = vmatprep.subr.mxu0 0.0
        %1303 = vmatpush1.msra.mxu0 0.0
        %1304 = vmatprep.subr.mxu0 0.0
        %1305 = vmatpush1.msra.mxu0 0.0
        %1306 = vmatprep.subr.mxu0 0.0
        %1307 = vmatpush1.msra.mxu0 0.0
        %1308 = vmatprep.mubr.f32.mxu0 0.0
        %1309 = vmatmul.mubr.f32.gmra.mrb[0].mxu0 %v1220
        %v1310 = vpop.f32.mrb[0].mxu0
        %v1311 = vadd.f32 %v1242, %v1310
        %v1312 = vpop.f32.mrb[0].mxu0
        %1313 = vdwg.mxu0
        %v1314 = vadd.f32 %v1106, %v1311
        %v1315 = vsel %vm567, %v1314, 0.0
        %1316 = vadd.xlane.f32.xlu0 %v1315
        %v1317 = vpop.xlane.xlu0 %1316
        %v1318 = vmul.f32 %v1317, %v571
        %v1319 = vsub.f32 %v1314, %v1318
        %v1320 = vmul.f32 %v1319, %v1319
        %v1321 = vsel %vm567, %v1320, 0.0
        %1322 = vadd.xlane.f32.xlu0 %v1321
        %v1323 = vpop.xlane.xlu0 %1322
        %v1324 = vmul.f32 %v1323, %v571
        %v1325 = vadd.f32 %v1324, 1e-05
        %v1326 = vrsqrt.pop %v1325
        %v1327 = vmul.f32 %v1319, %v1326
        %v1328 = vmul.f32 %v1327, %v586
        %v1329 = vadd.f32 %v1328, %v593
        %v1331 = vsel %vm567, %v1329, 0
        %1333 = vmatprep.subr.mxu0 0.0
        %1334 = vmatpush1.msra.mxu0 %v596
        %1335 = vmatprep.subr.mxu0 0.0
        %1336 = vmatpush1.msra.mxu0 %v597
        %1337 = vmatprep.subr.mxu0 0.0
        %1338 = vmatpush1.msra.mxu0 %v598
        %1339 = vmatprep.subr.mxu0 0.0
        %1340 = vmatpush1.msra.mxu0 %v599
        %1341 = vmatprep.subr.mxu0 0.0
        %1342 = vmatpush1.msra.mxu0 0.0
        %1343 = vmatprep.subr.mxu0 0.0
        %1344 = vmatpush1.msra.mxu0 0.0
        %1345 = vmatprep.subr.mxu0 0.0
        %1346 = vmatpush1.msra.mxu0 0.0
        %1347 = vmatprep.subr.mxu0 0.0
        %1348 = vmatpush1.msra.mxu0 0.0
        %1349 = vmatprep.subr.mxu0 0.0
        %1350 = vmatpush1.msra.mxu0 0.0
        %1351 = vmatprep.subr.mxu0 0.0
        %1352 = vmatpush1.msra.mxu0 0.0
        %1353 = vmatprep.subr.mxu0 0.0
        %1354 = vmatpush1.msra.mxu0 0.0
        %1355 = vmatprep.subr.mxu0 0.0
        %1356 = vmatpush1.msra.mxu0 0.0
        %1357 = vmatprep.subr.mxu0 0.0
        %1358 = vmatpush1.msra.mxu0 0.0
        %1359 = vmatprep.subr.mxu0 0.0
        %1360 = vmatpush1.msra.mxu0 0.0
        %1361 = vmatprep.subr.mxu0 0.0
        %1362 = vmatpush1.msra.mxu0 0.0
        %1363 = vmatprep.subr.mxu0 0.0
        %1364 = vmatpush1.msra.mxu0 0.0
        %1365 = vmatprep.subr.mxu0 0.0
        %1366 = vmatpush1.msra.mxu0 0.0
        %1367 = vmatprep.subr.mxu0 0.0
        %1368 = vmatpush1.msra.mxu0 0.0
        %1369 = vmatprep.subr.mxu0 0.0
        %1370 = vmatpush1.msra.mxu0 0.0
        %1371 = vmatprep.subr.mxu0 0.0
        %1372 = vmatpush1.msra.mxu0 0.0
        %1373 = vmatprep.subr.mxu0 0.0
        %1374 = vmatpush1.msra.mxu0 0.0
        %1375 = vmatprep.subr.mxu0 0.0
        %1376 = vmatpush1.msra.mxu0 0.0
        %1377 = vmatprep.subr.mxu0 0.0
        %1378 = vmatpush1.msra.mxu0 0.0
        %1379 = vmatprep.subr.mxu0 0.0
        %1380 = vmatpush1.msra.mxu0 0.0
        %1381 = vmatprep.subr.mxu0 0.0
        %1382 = vmatpush1.msra.mxu0 0.0
        %1383 = vmatprep.subr.mxu0 0.0
        %1384 = vmatpush1.msra.mxu0 0.0
        %1385 = vmatprep.subr.mxu0 0.0
        %1386 = vmatpush1.msra.mxu0 0.0
        %1387 = vmatprep.subr.mxu0 0.0
        %1388 = vmatpush1.msra.mxu0 0.0
        %1389 = vmatprep.subr.mxu0 0.0
        %1390 = vmatpush1.msra.mxu0 0.0
        %1391 = vmatprep.subr.mxu0 0.0
        %1392 = vmatpush1.msra.mxu0 0.0
        %1393 = vmatprep.subr.mxu0 0.0
        %1394 = vmatpush1.msra.mxu0 0.0
        %1395 = vmatprep.subr.mxu0 0.0
        %1396 = vmatpush1.msra.mxu0 0.0
        %1397 = vmatprep.mubr.f32.mxu0 0.0
        %1398 = vmatmul.mubr.f32.gmra.mrb[0].mxu0 %v1331
        %v1399 = vpop.f32.mrb[0].mxu0
        %v1400 = vadd.f32 %v605, %v1399
        %v1401 = vpop.f32.mrb[0].mxu0
        %1402 = vdwg.mxu0
        %1404 = vrot.lane.b32.xlu0 %v1400, 96
        %v1405 = vpop.permute.xlu0 %1404
        %v1406 = vsel %vm683, %v1400, 0
        %v1408 = vsel %vm683, %v1405, 0
        %1410 = vmatprep.subr.mxu0 0.0
        %1411 = vmatpush1.xpose.msra.mxu0 %v1408
        %1412 = vmatprep.subr.mxu0 0.0
        %1413 = vmatpush1.xpose.msra.mxu0 0.0
        %1414 = vmatprep.subr.mxu0 0.0
        %1415 = vmatpush1.xpose.msra.mxu0 0.0
        %1416 = vmatprep.subr.mxu0 0.0
        %1417 = vmatpush1.xpose.msra.mxu0 0.0
        %1418 = vmatprep.subr.mxu0 0.0
        %1419 = vmatpush1.xpose.msra.mxu0 0.0
        %1420 = vmatprep.subr.mxu0 0.0
        %1421 = vmatpush1.xpose.msra.mxu0 0.0
        %1422 = vmatprep.subr.mxu0 0.0
        %1423 = vmatpush1.xpose.msra.mxu0 0.0
        %1424 = vmatprep.subr.mxu0 0.0
        %1425 = vmatpush1.xpose.msra.mxu0 0.0
        %1426 = vmatprep.subr.mxu0 0.0
        %1427 = vmatpush1.xpose.msra.mxu0 0.0
        %1428 = vmatprep.subr.mxu0 0.0
        %1429 = vmatpush1.xpose.msra.mxu0 0.0
        %1430 = vmatprep.subr.mxu0 0.0
        %1431 = vmatpush1.xpose.msra.mxu0 0.0
        %1432 = vmatprep.subr.mxu0 0.0
        %1433 = vmatpush1.xpose.msra.mxu0 0.0
        %1434 = vmatprep.subr.mxu0 0.0
        %1435 = vmatpush1.xpose.msra.mxu0 0.0
        %1436 = vmatprep.subr.mxu0 0.0
        %1437 = vmatpush1.xpose.msra.mxu0 0.0
        %1438 = vmatprep.subr.mxu0 0.0
        %1439 = vmatpush1.xpose.msra.mxu0 0.0
        %1440 = vmatprep.subr.mxu0 0.0
        %1441 = vmatpush1.xpose.msra.mxu0 0.0
        %1442 = vmatprep.subr.mxu0 0.0
        %1443 = vmatpush1.xpose.msra.mxu0 0.0
        %1444 = vmatprep.subr.mxu0 0.0
        %1445 = vmatpush1.xpose.msra.mxu0 0.0
        %1446 = vmatprep.subr.mxu0 0.0
        %1447 = vmatpush1.xpose.msra.mxu0 0.0
        %1448 = vmatprep.subr.mxu0 0.0
        %1449 = vmatpush1.xpose.msra.mxu0 0.0
        %1450 = vmatprep.subr.mxu0 0.0
        %1451 = vmatpush1.xpose.msra.mxu0 0.0
        %1452 = vmatprep.subr.mxu0 0.0
        %1453 = vmatpush1.xpose.msra.mxu0 0.0
        %1454 = vmatprep.subr.mxu0 0.0
        %1455 = vmatpush1.xpose.msra.mxu0 0.0
        %1456 = vmatprep.subr.mxu0 0.0
        %1457 = vmatpush1.xpose.msra.mxu0 0.0
        %1458 = vmatprep.subr.mxu0 0.0
        %1459 = vmatpush1.xpose.msra.mxu0 0.0
        %1460 = vmatprep.subr.mxu0 0.0
        %1461 = vmatpush1.xpose.msra.mxu0 0.0
        %1462 = vmatprep.subr.mxu0 0.0
        %1463 = vmatpush1.xpose.msra.mxu0 0.0
        %1464 = vmatprep.subr.mxu0 0.0
        %1465 = vmatpush1.xpose.msra.mxu0 0.0
        %1466 = vmatprep.subr.mxu0 0.0
        %1467 = vmatpush1.xpose.msra.mxu0 0.0
        %1468 = vmatprep.subr.mxu0 0.0
        %1469 = vmatpush1.xpose.msra.mxu0 0.0
        %1470 = vmatprep.subr.mxu0 0.0
        %1471 = vmatpush1.xpose.msra.mxu0 0.0
        %1472 = vmatprep.subr.mxu0 0.0
        %1473 = vmatpush1.xpose.msra.mxu0 0.0
        %1474 = vmatprep.mubr.f32.mxu0 0.0
        %1475 = vmatmul.mubr.f32.gmra.mrb[0].mxu0 %v1406
        %v1476 = vpop.f32.mrb[0].mxu0
        %v1477 = vadd.f32 0.0, %v1476
        %v1478 = vpop.f32.mrb[0].mxu0
        %1479 = vdwg.mxu0
        %v1480 = vsel %vm564, %v1477, 0.0
        %vm1481 = vcmp.eq.f32.partialorder %v1480, 0.0
        %v1482 = vsel %vm1481, -inf, %v1480
        %v1483 = vsel %vm761, %v1482, -inf
        %1484 = vmax.xlane.f32.xlu0 %v1483
        %v1485 = vpop.xlane.xlu0 %1484
        %v1486 = vsub.f32 %v1482, %v1485
        %v1487 = vmul.f32 %v1486, 1.442695
        %v1488 = vpow.pop %v1487
        %v1489 = vsel %vm761, %v1488, 0.0
        %1490 = vadd.xlane.f32.xlu0 %v1489
        %v1491 = vpop.xlane.xlu0 %1490
        %v1492 = vrcp.pop %v1491
        %v1493 = vmul.f32 %v1488, %v1492
        %1494 = vrot.lane.b32.xlu0 %v1400, 64
        %v1495 = vpop.permute.xlu0 %1494
        %v1498 = vsel %vm761, %v1493, 0
        %1500 = vmatprep.subr.mxu0 0.0
        %1501 = vmatpush1.msra.mxu0 %v1495
        %1502 = vmatprep.subr.mxu0 0.0
        %1503 = vmatpush1.msra.mxu0 0.0
        %1504 = vmatprep.subr.mxu0 0.0
        %1505 = vmatpush1.msra.mxu0 0.0
        %1506 = vmatprep.subr.mxu0 0.0
        %1507 = vmatpush1.msra.mxu0 0.0
        %1508 = vmatprep.subr.mxu0 0.0
        %1509 = vmatpush1.msra.mxu0 0.0
        %1510 = vmatprep.subr.mxu0 0.0
        %1511 = vmatpush1.msra.mxu0 0.0
        %1512 = vmatprep.subr.mxu0 0.0
        %1513 = vmatpush1.msra.mxu0 0.0
        %1514 = vmatprep.subr.mxu0 0.0
        %1515 = vmatpush1.msra.mxu0 0.0
        %1516 = vmatprep.subr.mxu0 0.0
        %1517 = vmatpush1.msra.mxu0 0.0
        %1518 = vmatprep.subr.mxu0 0.0
        %1519 = vmatpush1.msra.mxu0 0.0
        %1520 = vmatprep.subr.mxu0 0.0
        %1521 = vmatpush1.msra.mxu0 0.0
        %1522 = vmatprep.subr.mxu0 0.0
        %1523 = vmatpush1.msra.mxu0 0.0
        %1524 = vmatprep.subr.mxu0 0.0
        %1525 = vmatpush1.msra.mxu0 0.0
        %1526 = vmatprep.subr.mxu0 0.0
        %1527 = vmatpush1.msra.mxu0 0.0
        %1528 = vmatprep.subr.mxu0 0.0
        %1529 = vmatpush1.msra.mxu0 0.0
        %1530 = vmatprep.subr.mxu0 0.0
        %1531 = vmatpush1.msra.mxu0 0.0
        %1532 = vmatprep.subr.mxu0 0.0
        %1533 = vmatpush1.msra.mxu0 0.0
        %1534 = vmatprep.subr.mxu0 0.0
        %1535 = vmatpush1.msra.mxu0 0.0
        %1536 = vmatprep.subr.mxu0 0.0
        %1537 = vmatpush1.msra.mxu0 0.0
        %1538 = vmatprep.subr.mxu0 0.0
        %1539 = vmatpush1.msra.mxu0 0.0
        %1540 = vmatprep.subr.mxu0 0.0
        %1541 = vmatpush1.msra.mxu0 0.0
        %1542 = vmatprep.subr.mxu0 0.0
        %1543 = vmatpush1.msra.mxu0 0.0
        %1544 = vmatprep.subr.mxu0 0.0
        %1545 = vmatpush1.msra.mxu0 0.0
        %1546 = vmatprep.subr.mxu0 0.0
        %1547 = vmatpush1.msra.mxu0 0.0
        %1548 = vmatprep.subr.mxu0 0.0
        %1549 = vmatpush1.msra.mxu0 0.0
        %1550 = vmatprep.subr.mxu0 0.0
        %1551 = vmatpush1.msra.mxu0 0.0
        %1552 = vmatprep.subr.mxu0 0.0
        %1553 = vmatpush1.msra.mxu0 0.0
        %1554 = vmatprep.subr.mxu0 0.0
        %1555 = vmatpush1.msra.mxu0 0.0
        %1556 = vmatprep.subr.mxu0 0.0
        %1557 = vmatpush1.msra.mxu0 0.0
        %1558 = vmatprep.subr.mxu0 0.0
        %1559 = vmatpush1.msra.mxu0 0.0
        %1560 = vmatprep.subr.mxu0 0.0
        %1561 = vmatpush1.msra.mxu0 0.0
        %1562 = vmatprep.subr.mxu0 0.0
        %1563 = vmatpush1.msra.mxu0 0.0
        %1564 = vmatprep.mubr.f32.mxu0 0.0
        %1565 = vmatmul.mubr.f32.gmra.mrb[0].mxu0 %v1498
        %v1566 = vpop.f32.mrb[0].mxu0
        %v1567 = vadd.f32 0.0, %v1566
        %v1568 = vpop.f32.mrb[0].mxu0
        %1569 = vdwg.mxu0
        %1570 = vrot.lane.b32.xlu0 %v1400, 112
        %v1571 = vpop.permute.xlu0 %1570
        %1572 = vrot.lane.b32.xlu0 %v1400, 80
        %v1573 = vpop.permute.xlu0 %1572
        %v1574 = vsel %vm683, %v1571, 0
        %v1576 = vsel %vm683, %v1573, 0
        %1578 = vmatprep.subr.mxu0 0.0
        %1579 = vmatpush1.xpose.msra.mxu0 %v1576
        %1580 = vmatprep.subr.mxu0 0.0
        %1581 = vmatpush1.xpose.msra.mxu0 0.0
        %1582 = vmatprep.subr.mxu0 0.0
        %1583 = vmatpush1.xpose.msra.mxu0 0.0
        %1584 = vmatprep.subr.mxu0 0.0
        %1585 = vmatpush1.xpose.msra.mxu0 0.0
        %1586 = vmatprep.subr.mxu0 0.0
        %1587 = vmatpush1.xpose.msra.mxu0 0.0
        %1588 = vmatprep.subr.mxu0 0.0
        %1589 = vmatpush1.xpose.msra.mxu0 0.0
        %1590 = vmatprep.subr.mxu0 0.0
        %1591 = vmatpush1.xpose.msra.mxu0 0.0
        %1592 = vmatprep.subr.mxu0 0.0
        %1593 = vmatpush1.xpose.msra.mxu0 0.0
        %1594 = vmatprep.subr.mxu0 0.0
        %1595 = vmatpush1.xpose.msra.mxu0 0.0
        %1596 = vmatprep.subr.mxu0 0.0
        %1597 = vmatpush1.xpose.msra.mxu0 0.0
        %1598 = vmatprep.subr.mxu0 0.0
        %1599 = vmatpush1.xpose.msra.mxu0 0.0
        %1600 = vmatprep.subr.mxu0 0.0
        %1601 = vmatpush1.xpose.msra.mxu0 0.0
        %1602 = vmatprep.subr.mxu0 0.0
        %1603 = vmatpush1.xpose.msra.mxu0 0.0
        %1604 = vmatprep.subr.mxu0 0.0
        %1605 = vmatpush1.xpose.msra.mxu0 0.0
        %1606 = vmatprep.subr.mxu0 0.0
        %1607 = vmatpush1.xpose.msra.mxu0 0.0
        %1608 = vmatprep.subr.mxu0 0.0
        %1609 = vmatpush1.xpose.msra.mxu0 0.0
        %1610 = vmatprep.subr.mxu0 0.0
        %1611 = vmatpush1.xpose.msra.mxu0 0.0
        %1612 = vmatprep.subr.mxu0 0.0
        %1613 = vmatpush1.xpose.msra.mxu0 0.0
        %1614 = vmatprep.subr.mxu0 0.0
        %1615 = vmatpush1.xpose.msra.mxu0 0.0
        %1616 = vmatprep.subr.mxu0 0.0
        %1617 = vmatpush1.xpose.msra.mxu0 0.0
        %1618 = vmatprep.subr.mxu0 0.0
        %1619 = vmatpush1.xpose.msra.mxu0 0.0
        %1620 = vmatprep.subr.mxu0 0.0
        %1621 = vmatpush1.xpose.msra.mxu0 0.0
        %1622 = vmatprep.subr.mxu0 0.0
        %1623 = vmatpush1.xpose.msra.mxu0 0.0
        %1624 = vmatprep.subr.mxu0 0.0
        %1625 = vmatpush1.xpose.msra.mxu0 0.0
        %1626 = vmatprep.subr.mxu0 0.0
        %1627 = vmatpush1.xpose.msra.mxu0 0.0
        %1628 = vmatprep.subr.mxu0 0.0
        %1629 = vmatpush1.xpose.msra.mxu0 0.0
        %1630 = vmatprep.subr.mxu0 0.0
        %1631 = vmatpush1.xpose.msra.mxu0 0.0
        %1632 = vmatprep.subr.mxu0 0.0
        %1633 = vmatpush1.xpose.msra.mxu0 0.0
        %1634 = vmatprep.subr.mxu0 0.0
        %1635 = vmatpush1.xpose.msra.mxu0 0.0
        %1636 = vmatprep.subr.mxu0 0.0
        %1637 = vmatpush1.xpose.msra.mxu0 0.0
        %1638 = vmatprep.subr.mxu0 0.0
        %1639 = vmatpush1.xpose.msra.mxu0 0.0
        %1640 = vmatprep.subr.mxu0 0.0
        %1641 = vmatpush1.xpose.msra.mxu0 0.0
        %1642 = vmatprep.mubr.f32.mxu0 0.0
        %1643 = vmatmul.mubr.f32.gmra.mrb[0].mxu0 %v1574
        %v1644 = vpop.f32.mrb[0].mxu0
        %v1645 = vadd.f32 0.0, %v1644
        %v1646 = vpop.f32.mrb[0].mxu0
        %1647 = vdwg.mxu0
        %v1648 = vsel %vm564, %v1645, 0.0
        %vm1649 = vcmp.eq.f32.partialorder %v1648, 0.0
        %v1650 = vsel %vm1649, -inf, %v1648
        %v1651 = vsel %vm761, %v1650, -inf
        %1652 = vmax.xlane.f32.xlu0 %v1651
        %v1653 = vpop.xlane.xlu0 %1652
        %v1654 = vsub.f32 %v1650, %v1653
        %v1655 = vmul.f32 %v1654, 1.442695
        %v1656 = vpow.pop %v1655
        %v1657 = vsel %vm761, %v1656, 0.0
        %1658 = vadd.xlane.f32.xlu0 %v1657
        %v1659 = vpop.xlane.xlu0 %1658
        %v1660 = vrcp.pop %v1659
        %v1661 = vmul.f32 %v1656, %v1660
        %1662 = vrot.lane.b32.xlu0 %v1400, 48
        %v1663 = vpop.permute.xlu0 %1662
        %v1666 = vsel %vm761, %v1661, 0
        %1668 = vmatprep.subr.mxu0 0.0
        %1669 = vmatpush1.msra.mxu0 %v1663
        %1670 = vmatprep.subr.mxu0 0.0
        %1671 = vmatpush1.msra.mxu0 0.0
        %1672 = vmatprep.subr.mxu0 0.0
        %1673 = vmatpush1.msra.mxu0 0.0
        %1674 = vmatprep.subr.mxu0 0.0
        %1675 = vmatpush1.msra.mxu0 0.0
        %1676 = vmatprep.subr.mxu0 0.0
        %1677 = vmatpush1.msra.mxu0 0.0
        %1678 = vmatprep.subr.mxu0 0.0
        %1679 = vmatpush1.msra.mxu0 0.0
        %1680 = vmatprep.subr.mxu0 0.0
        %1681 = vmatpush1.msra.mxu0 0.0
        %1682 = vmatprep.subr.mxu0 0.0
        %1683 = vmatpush1.msra.mxu0 0.0
        %1684 = vmatprep.subr.mxu0 0.0
        %1685 = vmatpush1.msra.mxu0 0.0
        %1686 = vmatprep.subr.mxu0 0.0
        %1687 = vmatpush1.msra.mxu0 0.0
        %1688 = vmatprep.subr.mxu0 0.0
        %1689 = vmatpush1.msra.mxu0 0.0
        %1690 = vmatprep.subr.mxu0 0.0
        %1691 = vmatpush1.msra.mxu0 0.0
        %1692 = vmatprep.subr.mxu0 0.0
        %1693 = vmatpush1.msra.mxu0 0.0
        %1694 = vmatprep.subr.mxu0 0.0
        %1695 = vmatpush1.msra.mxu0 0.0
        %1696 = vmatprep.subr.mxu0 0.0
        %1697 = vmatpush1.msra.mxu0 0.0
        %1698 = vmatprep.subr.mxu0 0.0
        %1699 = vmatpush1.msra.mxu0 0.0
        %1700 = vmatprep.subr.mxu0 0.0
        %1701 = vmatpush1.msra.mxu0 0.0
        %1702 = vmatprep.subr.mxu0 0.0
        %1703 = vmatpush1.msra.mxu0 0.0
        %1704 = vmatprep.subr.mxu0 0.0
        %1705 = vmatpush1.msra.mxu0 0.0
        %1706 = vmatprep.subr.mxu0 0.0
        %1707 = vmatpush1.msra.mxu0 0.0
        %1708 = vmatprep.subr.mxu0 0.0
        %1709 = vmatpush1.msra.mxu0 0.0
        %1710 = vmatprep.subr.mxu0 0.0
        %1711 = vmatpush1.msra.mxu0 0.0
        %1712 = vmatprep.subr.mxu0 0.0
        %1713 = vmatpush1.msra.mxu0 0.0
        %1714 = vmatprep.subr.mxu0 0.0
        %1715 = vmatpush1.msra.mxu0 0.0
        %1716 = vmatprep.subr.mxu0 0.0
        %1717 = vmatpush1.msra.mxu0 0.0
        %1718 = vmatprep.subr.mxu0 0.0
        %1719 = vmatpush1.msra.mxu0 0.0
        %1720 = vmatprep.subr.mxu0 0.0
        %1721 = vmatpush1.msra.mxu0 0.0
        %1722 = vmatprep.subr.mxu0 0.0
        %1723 = vmatpush1.msra.mxu0 0.0
        %1724 = vmatprep.subr.mxu0 0.0
        %1725 = vmatpush1.msra.mxu0 0.0
        %1726 = vmatprep.subr.mxu0 0.0
        %1727 = vmatpush1.msra.mxu0 0.0
        %1728 = vmatprep.subr.mxu0 0.0
        %1729 = vmatpush1.msra.mxu0 0.0
        %1730 = vmatprep.subr.mxu0 0.0
        %1731 = vmatpush1.msra.mxu0 0.0
        %1732 = vmatprep.mubr.f32.mxu0 0.0
        %1733 = vmatmul.mubr.f32.gmra.mrb[0].mxu0 %v1666
        %v1734 = vpop.f32.mrb[0].mxu0
        %v1735 = vadd.f32 0.0, %v1734
        %v1736 = vpop.f32.mrb[0].mxu0
        %1737 = vdwg.mxu0
        %1739 = vrot.lane.b32.xlu0 %v1735, 16
        %v1740 = vpop.permute.xlu0 %1739
        %v1742 = vsel %vm683, %v1567, %v1740
        %v1744 = vsel %vm567, %v1742, 0
        %1746 = vmatprep.subr.mxu0 0.0
        %1747 = vmatpush1.msra.mxu0 %v1022
        %1748 = vmatprep.subr.mxu0 0.0
        %1749 = vmatpush1.msra.mxu0 %v1023
        %1750 = vmatprep.subr.mxu0 0.0
        %1751 = vmatpush1.msra.mxu0 %v1024
        %1752 = vmatprep.subr.mxu0 0.0
        %1753 = vmatpush1.msra.mxu0 %v1025
        %1754 = vmatprep.subr.mxu0 0.0
        %1755 = vmatpush1.msra.mxu0 0.0
        %1756 = vmatprep.subr.mxu0 0.0
        %1757 = vmatpush1.msra.mxu0 0.0
        %1758 = vmatprep.subr.mxu0 0.0
        %1759 = vmatpush1.msra.mxu0 0.0
        %1760 = vmatprep.subr.mxu0 0.0
        %1761 = vmatpush1.msra.mxu0 0.0
        %1762 = vmatprep.subr.mxu0 0.0
        %1763 = vmatpush1.msra.mxu0 0.0
        %1764 = vmatprep.subr.mxu0 0.0
        %1765 = vmatpush1.msra.mxu0 0.0
        %1766 = vmatprep.subr.mxu0 0.0
        %1767 = vmatpush1.msra.mxu0 0.0
        %1768 = vmatprep.subr.mxu0 0.0
        %1769 = vmatpush1.msra.mxu0 0.0
        %1770 = vmatprep.subr.mxu0 0.0
        %1771 = vmatpush1.msra.mxu0 0.0
        %1772 = vmatprep.subr.mxu0 0.0
        %1773 = vmatpush1.msra.mxu0 0.0
        %1774 = vmatprep.subr.mxu0 0.0
        %1775 = vmatpush1.msra.mxu0 0.0
        %1776 = vmatprep.subr.mxu0 0.0
        %1777 = vmatpush1.msra.mxu0 0.0
        %1778 = vmatprep.subr.mxu0 0.0
        %1779 = vmatpush1.msra.mxu0 0.0
        %1780 = vmatprep.subr.mxu0 0.0
        %1781 = vmatpush1.msra.mxu0 0.0
        %1782 = vmatprep.subr.mxu0 0.0
        %1783 = vmatpush1.msra.mxu0 0.0
        %1784 = vmatprep.subr.mxu0 0.0
        %1785 = vmatpush1.msra.mxu0 0.0
        %1786 = vmatprep.subr.mxu0 0.0
        %1787 = vmatpush1.msra.mxu0 0.0
        %1788 = vmatprep.subr.mxu0 0.0
        %1789 = vmatpush1.msra.mxu0 0.0
        %1790 = vmatprep.subr.mxu0 0.0
        %1791 = vmatpush1.msra.mxu0 0.0
        %1792 = vmatprep.subr.mxu0 0.0
        %1793 = vmatpush1.msra.mxu0 0.0
        %1794 = vmatprep.subr.mxu0 0.0
        %1795 = vmatpush1.msra.mxu0 0.0
        %1796 = vmatprep.subr.mxu0 0.0
        %1797 = vmatpush1.msra.mxu0 0.0
        %1798 = vmatprep.subr.mxu0 0.0
        %1799 = vmatpush1.msra.mxu0 0.0
        %1800 = vmatprep.subr.mxu0 0.0
        %1801 = vmatpush1.msra.mxu0 0.0
        %1802 = vmatprep.subr.mxu0 0.0
        %1803 = vmatpush1.msra.mxu0 0.0
        %1804 = vmatprep.subr.mxu0 0.0
        %1805 = vmatpush1.msra.mxu0 0.0
        %1806 = vmatprep.subr.mxu0 0.0
        %1807 = vmatpush1.msra.mxu0 0.0
        %1808 = vmatprep.subr.mxu0 0.0
        %1809 = vmatpush1.msra.mxu0 0.0
        %1810 = vmatprep.mubr.f32.mxu0 0.0
        %1811 = vmatmul.mubr.f32.gmra.mrb[0].mxu0 %v1744
        %v1812 = vpop.f32.mrb[0].mxu0
        %v1813 = vadd.f32 %v1031, %v1812
        %v1814 = vpop.f32.mrb[0].mxu0
        %1815 = vdwg.mxu0
        %v1816 = vadd.f32 %v1314, %v1813
        %v1817 = vsel %vm567, %v1816, 0.0
        %1818 = vadd.xlane.f32.xlu0 %v1817
        %v1819 = vpop.xlane.xlu0 %1818
        %v1820 = vmul.f32 %v1819, %v571
        %v1821 = vsub.f32 %v1816, %v1820
        %v1822 = vmul.f32 %v1821, %v1821
        %v1823 = vsel %vm567, %v1822, 0.0
        %1824 = vadd.xlane.f32.xlu0 %v1823
        %v1825 = vpop.xlane.xlu0 %1824
        %v1826 = vmul.f32 %v1825, %v571
        %v1827 = vadd.f32 %v1826, 1e-05
        %v1828 = vrsqrt.pop %v1827
        %v1829 = vmul.f32 %v1821, %v1828
        %v1830 = vmul.f32 %v1829, %v1126
        %v1831 = vadd.f32 %v1830, %v1133
        %v1833 = vsel %vm567, %v1831, 0
        %1835 = vmatprep.subr.mxu0 0.0
        %1836 = vmatpush1.msra.mxu0 %v1136
        %1837 = vmatprep.subr.mxu0 0.0
        %1838 = vmatpush1.msra.mxu0 %v1137
        %1839 = vmatprep.subr.mxu0 0.0
        %1840 = vmatpush1.msra.mxu0 %v1138
        %1841 = vmatprep.subr.mxu0 0.0
        %1842 = vmatpush1.msra.mxu0 %v1139
        %1843 = vmatprep.subr.mxu0 0.0
        %1844 = vmatpush1.msra.mxu0 0.0
        %1845 = vmatprep.subr.mxu0 0.0
        %1846 = vmatpush1.msra.mxu0 0.0
        %1847 = vmatprep.subr.mxu0 0.0
        %1848 = vmatpush1.msra.mxu0 0.0
        %1849 = vmatprep.subr.mxu0 0.0
        %1850 = vmatpush1.msra.mxu0 0.0
        %1851 = vmatprep.subr.mxu0 0.0
        %1852 = vmatpush1.msra.mxu0 0.0
        %1853 = vmatprep.subr.mxu0 0.0
        %1854 = vmatpush1.msra.mxu0 0.0
        %1855 = vmatprep.subr.mxu0 0.0
        %1856 = vmatpush1.msra.mxu0 0.0
        %1857 = vmatprep.subr.mxu0 0.0
        %1858 = vmatpush1.msra.mxu0 0.0
        %1859 = vmatprep.subr.mxu0 0.0
        %1860 = vmatpush1.msra.mxu0 0.0
        %1861 = vmatprep.subr.mxu0 0.0
        %1862 = vmatpush1.msra.mxu0 0.0
        %1863 = vmatprep.subr.mxu0 0.0
        %1864 = vmatpush1.msra.mxu0 0.0
        %1865 = vmatprep.subr.mxu0 0.0
        %1866 = vmatpush1.msra.mxu0 0.0
        %1867 = vmatprep.subr.mxu0 0.0
        %1868 = vmatpush1.msra.mxu0 0.0
        %1869 = vmatprep.subr.mxu0 0.0
        %1870 = vmatpush1.msra.mxu0 0.0
        %1871 = vmatprep.subr.mxu0 0.0
        %1872 = vmatpush1.msra.mxu0 0.0
        %1873 = vmatprep.subr.mxu0 0.0
        %1874 = vmatpush1.msra.mxu0 0.0
        %1875 = vmatprep.subr.mxu0 0.0
        %1876 = vmatpush1.msra.mxu0 0.0
        %1877 = vmatprep.subr.mxu0 0.0
        %1878 = vmatpush1.msra.mxu0 0.0
        %1879 = vmatprep.subr.mxu0 0.0
        %1880 = vmatpush1.msra.mxu0 0.0
        %1881 = vmatprep.subr.mxu0 0.0
        %1882 = vmatpush1.msra.mxu0 0.0
        %1883 = vmatprep.subr.mxu0 0.0
        %1884 = vmatpush1.msra.mxu0 0.0
        %1885 = vmatprep.subr.mxu0 0.0
        %1886 = vmatpush1.msra.mxu0 0.0
        %1887 = vmatprep.subr.mxu0 0.0
        %1888 = vmatpush1.msra.mxu0 0.0
        %1889 = vmatprep.subr.mxu0 0.0
        %1890 = vmatpush1.msra.mxu0 0.0
        %1891 = vmatprep.subr.mxu0 0.0
        %1892 = vmatpush1.msra.mxu0 0.0
        %1893 = vmatprep.subr.mxu0 0.0
        %1894 = vmatpush1.msra.mxu0 0.0
        %1895 = vmatprep.subr.mxu0 0.0
        %1896 = vmatpush1.msra.mxu0 0.0
        %1897 = vmatprep.subr.mxu0 0.0
        %1898 = vmatpush1.msra.mxu0 0.0
        %1899 = vmatprep.mubr.f32.mxu0 0.0
        %1900 = vmatmul.mubr.f32.gmra.mrb[0].mxu0 %v1833
        %v1901 = vpop.f32.mrb[0].mxu0
        %v1902 = vadd.f32 %v1145, %v1901
        %v1903 = vpop.f32.mrb[0].mxu0
        %1904 = vdwg.mxu0
        %v1905 = vmax.f32 %v1902, 0.0
        %1906 = vmatprep.subr.mxu0 0.0
        %1907 = vmatpush1.msra.mxu0 %v1221
        %1908 = vmatprep.subr.mxu0 0.0
        %1909 = vmatpush1.msra.mxu0 %v1222
        %1910 = vmatprep.subr.mxu0 0.0
        %1911 = vmatpush1.msra.mxu0 %v1223
        %1912 = vmatprep.subr.mxu0 0.0
        %1913 = vmatpush1.msra.mxu0 %v1224
        %1914 = vmatprep.subr.mxu0 0.0
        %1915 = vmatpush1.msra.mxu0 %v1225
        %1916 = vmatprep.subr.mxu0 0.0
        %1917 = vmatpush1.msra.mxu0 %v1226
        %1918 = vmatprep.subr.mxu0 0.0
        %1919 = vmatpush1.msra.mxu0 %v1227
        %1920 = vmatprep.subr.mxu0 0.0
        %1921 = vmatpush1.msra.mxu0 %v1228
        %1922 = vmatprep.subr.mxu0 0.0
        %1923 = vmatpush1.msra.mxu0 %v1229
        %1924 = vmatprep.subr.mxu0 0.0
        %1925 = vmatpush1.msra.mxu0 %v1230
        %1926 = vmatprep.subr.mxu0 0.0
        %1927 = vmatpush1.msra.mxu0 %v1231
        %1928 = vmatprep.subr.mxu0 0.0
        %1929 = vmatpush1.msra.mxu0 %v1232
        %1930 = vmatprep.subr.mxu0 0.0
        %1931 = vmatpush1.msra.mxu0 %v1233
        %1932 = vmatprep.subr.mxu0 0.0
        %1933 = vmatpush1.msra.mxu0 %v1234
        %1934 = vmatprep.subr.mxu0 0.0
        %1935 = vmatpush1.msra.mxu0 %v1235
        %1936 = vmatprep.subr.mxu0 0.0
        %1937 = vmatpush1.msra.mxu0 %v1236
        %1938 = vmatprep.subr.mxu0 0.0
        %1939 = vmatpush1.msra.mxu0 0.0
        %1940 = vmatprep.subr.mxu0 0.0
        %1941 = vmatpush1.msra.mxu0 0.0
        %1942 = vmatprep.subr.mxu0 0.0
        %1943 = vmatpush1.msra.mxu0 0.0
        %1944 = vmatprep.subr.mxu0 0.0
        %1945 = vmatpush1.msra.mxu0 0.0
        %1946 = vmatprep.subr.mxu0 0.0
        %1947 = vmatpush1.msra.mxu0 0.0
        %1948 = vmatprep.subr.mxu0 0.0
        %1949 = vmatpush1.msra.mxu0 0.0
        %1950 = vmatprep.subr.mxu0 0.0
        %1951 = vmatpush1.msra.mxu0 0.0
        %1952 = vmatprep.subr.mxu0 0.0
        %1953 = vmatpush1.msra.mxu0 0.0
        %1954 = vmatprep.subr.mxu0 0.0
        %1955 = vmatpush1.msra.mxu0 0.0
        %1956 = vmatprep.subr.mxu0 0.0
        %1957 = vmatpush1.msra.mxu0 0.0
        %1958 = vmatprep.subr.mxu0 0.0
        %1959 = vmatpush1.msra.mxu0 0.0
        %1960 = vmatprep.subr.mxu0 0.0
        %1961 = vmatpush1.msra.mxu0 0.0
        %1962 = vmatprep.subr.mxu0 0.0
        %1963 = vmatpush1.msra.mxu0 0.0
        %1964 = vmatprep.subr.mxu0 0.0
        %1965 = vmatpush1.msra.mxu0 0.0
        %1966 = vmatprep.subr.mxu0 0.0
        %1967 = vmatpush1.msra.mxu0 0.0
        %1968 = vmatprep.subr.mxu0 0.0
        %1969 = vmatpush1.msra.mxu0 0.0
        %1970 = vmatprep.mubr.f32.mxu0 0.0
        %1971 = vmatmul.mubr.f32.gmra.mrb[0].mxu0 %v1905
        %v1972 = vpop.f32.mrb[0].mxu0
        %v1973 = vadd.f32 %v1242, %v1972
        %v1974 = vpop.f32.mrb[0].mxu0
        %1975 = vdwg.mxu0
        %v1976 = vadd.f32 %v1816, %v1973
        %v1977 = vld [vmem:[%s13] sm:$0x1]
        %v1978 = vld [vmem:[%s14] sm:$0x1]
        %v1979 = vsel %vm567, %v1976, 0.0
        %1980 = vadd.xlane.f32.xlu0 %v1979
        %v1981 = vpop.xlane.xlu0 %1980
        %v1982 = vmul.f32 %v1981, %v571
        %v1983 = vsub.f32 %v1976, %v1982
        %v1984 = vmul.f32 %v1983, %v1983
        %v1985 = vsel %vm567, %v1984, 0.0
        %1986 = vadd.xlane.f32.xlu0 %v1985
        %v1987 = vpop.xlane.xlu0 %1986
        %v1988 = vmul.f32 %v1987, %v571
        %v1989 = vadd.f32 %v1988, 1e-05
        %v1990 = vrsqrt.pop %v1989
        %v1991 = vmul.f32 %v1983, %v1990
        %v1993 = vlaneseq
        %v1994 = vshrl.u32 %v1993, 7
        %v1995 = vsub.s32 0, %v1994
        %v1996 = vrot.slane %v1977, %v1995
        %v1998 = vmul.f32 %v1991, %v1996
        %v2000 = vlaneseq
        %v2001 = vshrl.u32 %v2000, 7
        %v2002 = vsub.s32 0, %v2001
        %v2003 = vrot.slane %v1978, %v2002
        %v2005 = vadd.f32 %v1998, %v2003
        %v2006 = vld [vmem:[#allocation2] sm:$0xff]
        %v2007 = vld [vmem:[#allocation2 + $0x8] sm:$0xff]
        %v2008 = vld [vmem:[#allocation2 + $0x10] sm:$0xff]
        %v2009 = vld [vmem:[#allocation2 + $0x18] sm:$0xff]
        %v2010 = vld [vmem:[%s16] sm:$0x1]
        %v2012 = vlaneseq
        %v2013 = vshrl.u32 %v2012, 7
        %v2014 = vsub.s32 0, %v2013
        %v2015 = vrot.slane %v2010, %v2014
        %v2018 = vsel %vm567, %v2005, 0
        %2020 = vmatprep.subr.mxu0 0.0
        %2021 = vmatpush1.msra.mxu0 %v2006
        %2022 = vmatprep.subr.mxu0 0.0
        %2023 = vmatpush1.msra.mxu0 %v2007
        %2024 = vmatprep.subr.mxu0 0.0
        %2025 = vmatpush1.msra.mxu0 %v2008
        %2026 = vmatprep.subr.mxu0 0.0
        %2027 = vmatpush1.msra.mxu0 %v2009
        %2028 = vmatprep.subr.mxu0 0.0
        %2029 = vmatpush1.msra.mxu0 0.0
        %2030 = vmatprep.subr.mxu0 0.0
        %2031 = vmatpush1.msra.mxu0 0.0
        %2032 = vmatprep.subr.mxu0 0.0
        %2033 = vmatpush1.msra.mxu0 0.0
        %2034 = vmatprep.subr.mxu0 0.0
        %2035 = vmatpush1.msra.mxu0 0.0
        %2036 = vmatprep.subr.mxu0 0.0
        %2037 = vmatpush1.msra.mxu0 0.0
        %2038 = vmatprep.subr.mxu0 0.0
        %2039 = vmatpush1.msra.mxu0 0.0
        %2040 = vmatprep.subr.mxu0 0.0
        %2041 = vmatpush1.msra.mxu0 0.0
        %2042 = vmatprep.subr.mxu0 0.0
        %2043 = vmatpush1.msra.mxu0 0.0
        %2044 = vmatprep.subr.mxu0 0.0
        %2045 = vmatpush1.msra.mxu0 0.0
        %2046 = vmatprep.subr.mxu0 0.0
        %2047 = vmatpush1.msra.mxu0 0.0
        %2048 = vmatprep.subr.mxu0 0.0
        %2049 = vmatpush1.msra.mxu0 0.0
        %2050 = vmatprep.subr.mxu0 0.0
        %2051 = vmatpush1.msra.mxu0 0.0
        %2052 = vmatprep.subr.mxu0 0.0
        %2053 = vmatpush1.msra.mxu0 0.0
        %2054 = vmatprep.subr.mxu0 0.0
        %2055 = vmatpush1.msra.mxu0 0.0
        %2056 = vmatprep.subr.mxu0 0.0
        %2057 = vmatpush1.msra.mxu0 0.0
        %2058 = vmatprep.subr.mxu0 0.0
        %2059 = vmatpush1.msra.mxu0 0.0
        %2060 = vmatprep.subr.mxu0 0.0
        %2061 = vmatpush1.msra.mxu0 0.0
        %2062 = vmatprep.subr.mxu0 0.0
        %2063 = vmatpush1.msra.mxu0 0.0
        %2064 = vmatprep.subr.mxu0 0.0
        %2065 = vmatpush1.msra.mxu0 0.0
        %2066 = vmatprep.subr.mxu0 0.0
        %2067 = vmatpush1.msra.mxu0 0.0
        %2068 = vmatprep.subr.mxu0 0.0
        %2069 = vmatpush1.msra.mxu0 0.0
        %2070 = vmatprep.subr.mxu0 0.0
        %2071 = vmatpush1.msra.mxu0 0.0
        %2072 = vmatprep.subr.mxu0 0.0
        %2073 = vmatpush1.msra.mxu0 0.0
        %2074 = vmatprep.subr.mxu0 0.0
        %2075 = vmatpush1.msra.mxu0 0.0
        %2076 = vmatprep.subr.mxu0 0.0
        %2077 = vmatpush1.msra.mxu0 0.0
        %2078 = vmatprep.subr.mxu0 0.0
        %2079 = vmatpush1.msra.mxu0 0.0
        %2080 = vmatprep.subr.mxu0 0.0
        %2081 = vmatpush1.msra.mxu0 0.0
        %2082 = vmatprep.subr.mxu0 0.0
        %2083 = vmatpush1.msra.mxu0 0.0
        %2084 = vmatprep.mubr.f32.mxu0 0.0
        %2085 = vmatmul.mubr.f32.gmra.mrb[0].mxu0 %v2018
        %v2086 = vpop.f32.mrb[0].mxu0
        %v2087 = vadd.f32 %v2015, %v2086
        %v2088 = vpop.f32.mrb[0].mxu0
        %2089 = vdwg.mxu0
        %2090 = vst [vmem:[%s554] sm:$0xff] %v2087
        %s2091 = sand.u32 %s402, 1
        %s2092 = scalar_lea.sflag [#allocation4], %s2091
        %s2093 = sand.u32 %s402, 1
        %s2094 = smul.addr %s2093, 8
        %s2095 = scalar_lea.vmem [#allocation5], %s2094
        // Predicated region
        $region93: #{_lambda_.1} parent=87 // pred_check
          %p2096 = pneg %p412
        $region94: #{_lambda_.1} parent=87 // pred_check_branch
          %2098 = sbr.rel (%p2096) target = $region96
        $region95: #{_lambda_.1} parent=87 // pred_region
          %s2100 = ssub.s32 128, 128
          %2101 = vsyncadd %s2092, %s2100
          %s2102 = smul.addr %s32, 128
          %s2103 = scalar_lea.hbm %s17, %s2102
          %s2105 = sshll.u32 %s2095, 4
          %s2106 = int_to_ptr.vmem [resolvable:$true] %s2105
          %2108 = dma.vmem_to_hbm [thread:$0]  %s2106, 128, %s2103, %s2092
        $region96: #{_lambda_.1} parent=87 // pred_fallthru
          _
      $region88: #{_lambda_.1} parent=5 // pred_fallthru
        _
      %p2109 = scmp.le.s32.totalorder 2, %s27
      // Predicated region
      $region97: #{_lambda_.1} parent=5 // pred_check
        %p2110 = pneg %p2109
      $region98: #{_lambda_.1} parent=5 // pred_check_branch
        %2112 = sbr.rel (%p2110) target = $region100
      $region99: #{_lambda_.1} parent=5 // pred_region
        %s2113 = ssub.s32 %s27, 2
        // Predicated region
        $region101: #{_lambda_.1} parent=99 // pred_check
          %p2114 = pneg %p418
        $region102: #{_lambda_.1} parent=99 // pred_check_branch
          %2116 = sbr.rel (%p2114) target = $region104
        $region103: #{_lambda_.1} parent=99 // pred_region
          %s2117 = sand.u32 %s403, 1
          %s2118 = scalar_lea.sflag [#allocation4], %s2117
          %s2119 = sand.u32 %s403, 1
          %s2120 = smul.addr %s2119, 8
          %s2121 = scalar_lea.vmem [#allocation5], %s2120
          %2122 = dma.done %s2118, 128
        $region104: #{_lambda_.1} parent=99 // pred_fallthru
          _
      $region100: #{_lambda_.1} parent=5 // pred_fallthru
        _
    $region6: #{_lambda_.1} parent=1 // loop_footer
      %s31 = sadd.s32 1, %s27
    $region7: #{_lambda_.1} parent=1 // loop_footer_branch
      %26 = sbr.rel target = $region3
    $region8: #{_lambda_.1} parent=1 // loop_exit
      _
    %2123 = vsyncpa [#allocation3], 1
    %s2124 = scalar_lea.sflag [#allocation3], 1
    %2125 = vsyncpa %s2124, 1
    %2126 = vsyncpa [#allocation4], 1
    %s2127 = scalar_lea.sflag [#allocation4], 1
    %2128 = vsyncpa %s2127, 1

</llo_original>
